<compile_context>
chip_gen: v6e
topology: v6e:2x2x1
jax: 0.10.0
libtpu: 0.0.40
codegen_flags: <defaults>
</compile_context>

<pallas_src>
import jax
import jax.numpy as jnp
from jax.experimental import pallas as pl
from jax.experimental.pallas import tpu as pltpu

NUM_FEATURES = 32
NUM_BINS = 11
NUM_CLASSES = 10
IN_DIM = NUM_FEATURES * NUM_BINS   # 352 (full last dim of x -> legal block width)
H1 = 384
H2 = 192
OUT_PAD = 128                      # 10 -> 128: lane-dense, unmasked vst


def _round_up(x, m):
    return (x + m - 1) // m * m


def _choose_batch_tile(B, block_b):
    """Padding-aware batch tile: near-even tiles, >=2 grid steps when possible (v7x dual-TC)."""
    if B <= 32:
        return B                                   # single tile equal to the full batch dim (always legal)
    n_steps = max(2, pl.cdiv(B, block_b))          # >=2 steps so the 'parallel' axis feeds both v7x TCs
    tb = _round_up(pl.cdiv(B, n_steps), 16)        # sublane-friendly for the bf16 output tile
    return min(tb, block_b)


def _mlp_kernel(x_ref, w1_ref, b1_ref, w2_ref, b2_ref, w3_ref, b3_ref, o_ref):
    # Layer 1: Linear(352->384) + ReLU.  bf16 MXU operands, f32 accumulation, f32 epilogue.
    x = x_ref[...].astype(jnp.bfloat16)
    h1 = jnp.dot(x, w1_ref[...], preferred_element_type=jnp.float32)
    h1 = jnp.maximum(h1 + b1_ref[...], 0.0)
    # Layer 2: Linear(384->192) + ReLU
    h2 = jnp.dot(h1.astype(jnp.bfloat16), w2_ref[...], preferred_element_type=jnp.float32)
    h2 = jnp.maximum(h2 + b2_ref[...], 0.0)
    # Layer 3: Linear(192->10), columns zero-padded to 128 (lane-dense store).
    out = jnp.dot(h2.astype(jnp.bfloat16), w3_ref[...], preferred_element_type=jnp.float32)
    o_ref[...] = (out + b3_ref[...]).astype(o_ref.dtype)


def prepare_params(params):
    """One-time prep: bf16 weights for the MXU, f32 biases, classifier padded to 128 lanes."""
    w1, b1, w2, b2, w3, b3 = params
    w3p = jnp.zeros((H2, OUT_PAD), jnp.float32).at[:, :NUM_CLASSES].set(w3).astype(jnp.bfloat16)
    b3p = jnp.zeros((1, OUT_PAD), jnp.float32).at[:, :NUM_CLASSES].set(b3)
    return (w1.astype(jnp.bfloat16), b1.astype(jnp.float32),
            w2.astype(jnp.bfloat16), b2.astype(jnp.float32),
            w3p, b3p)


def _mlp_pallas(x, prepped_params, tb, *, single_buffer_weights):
    w1, b1, w2, b2, w3, b3 = prepped_params
    B = x.shape[0]
    n_tiles = pl.cdiv(B, tb)

    res_kwargs = {}
    if single_buffer_weights:
        # Constant block index -> fetched once, VMEM-resident; a 2nd pipeline buffer is never used.
        res_kwargs["pipeline_mode"] = pl.Buffered(1)

    def resident(shape):
        return pl.BlockSpec(shape, lambda i: (0, 0), **res_kwargs)

    rows = n_tiles * tb
    flops = 2 * rows * (IN_DIM * H1 + H1 * H2 + H2 * OUT_PAD)
    bytes_accessed = (rows * IN_DIM * x.dtype.itemsize
                      + 2 * (w1.size + w2.size + w3.size)
                      + 4 * (b1.size + b2.size + b3.size)
                      + 2 * rows * OUT_PAD)

    return pl.pallas_call(
        _mlp_kernel,
        out_shape=jax.ShapeDtypeStruct((B, OUT_PAD), jnp.bfloat16),
        grid_spec=pltpu.PrefetchScalarGridSpec(
            num_scalar_prefetch=0,
            grid=(n_tiles,),
            in_specs=[
                pl.BlockSpec((tb, IN_DIM), lambda i: (i, 0)),   # pipelined x tile, no pre-pad/cast pass
                resident((IN_DIM, H1)), resident((1, H1)),
                resident((H1, H2)), resident((1, H2)),
                resident((H2, OUT_PAD)), resident((1, OUT_PAD)),
            ],
            out_specs=pl.BlockSpec((tb, OUT_PAD), lambda i: (i, 0)),
        ),
        compiler_params=pltpu.CompilerParams(
            dimension_semantics=("parallel",),   # both TCs on v7x; harmless on v5e/v6e
        ),
        cost_estimate=pl.CostEstimate(
            flops=flops, transcendentals=0, bytes_accessed=bytes_accessed),
    )(x, w1, b1, w2, b2, w3, b3)


def representation_transformation(x, prepped_params, *, block_b=512):
    """x: (B, 352) f32 (or bf16) -> (B, 10) f32 logits."""
    B = x.shape[0]
    # block_b=512 keeps the VMEM footprint (~3-4 MiB) safely under v5e's 16 MiB scoped default;
    # on v6e/v7x it may be raised (with vmem_limit_bytes) if DMA exposure shows up at large B.
    tb = _choose_batch_tile(B, block_b)
    try:
        out = _mlp_pallas(x, prepped_params, tb, single_buffer_weights=True)
    except Exception:  # fallback for JAX versions without BlockSpec.pipeline_mode / Buffered(1)
        out = _mlp_pallas(x, prepped_params, tb, single_buffer_weights=False)
    # Drop the padded classifier columns; rows past B were never written (partial-block clip).
    return out[:, :NUM_CLASSES].astype(jnp.float32)


def init_params(key, num_features=NUM_FEATURES, num_bins=NUM_BINS, num_classes=NUM_CLASSES):
    """PyTorch-style init U(-1/sqrt(fan_in), 1/sqrt(fan_in)). Weights (in, out), biases (1, out)."""
    dims = [(num_features * num_bins, H1), (H1, H2), (H2, num_classes)]
    params = []
    for fan_in, fan_out in dims:
        key, kw, kb = jax.random.split(key, 3)
        bound = 1.0 / (fan_in ** 0.5)
        w = jax.random.uniform(kw, (fan_in, fan_out), jnp.float32, -bound, bound)
        b = jax.random.uniform(kb, (1, fan_out), jnp.float32, -bound, bound)
        params += [w, b]
    return tuple(params)


def _reference_f32(x, params):
    w1, b1, w2, b2, w3, b3 = params
    h1 = jnp.maximum(x @ w1 + b1, 0.0)
    h2 = jnp.maximum(h1 @ w2 + b2, 0.0)
    return h2 @ w3 + b3


def _reference_bf16(x, params):
    """Mirrors kernel numerics: bf16 matmul operands, f32 acc + bias/ReLU, bf16 output store."""
    w1, b1, w2, b2, w3, b3 = params
    bf = jnp.bfloat16
    h1 = jnp.maximum(jnp.dot(x.astype(bf), w1.astype(bf),
                             preferred_element_type=jnp.float32) + b1, 0.0)
    h2 = jnp.maximum(jnp.dot(h1.astype(bf), w2.astype(bf),
                             preferred_element_type=jnp.float32) + b2, 0.0)
    out = jnp.dot(h2.astype(bf), w3.astype(bf),
                  preferred_element_type=jnp.float32) + b3
    return out.astype(bf).astype(jnp.float32)


if __name__ == "__main__":
    key = jax.random.PRNGKey(0)
    k_params, k_x = jax.random.split(key)

    params = init_params(k_params)
    prepped = prepare_params(params)

    # batch=8: single full tile.  batch=37: two tiles with a clipped partial last tile.
    for batch in (8, 37):
        x = jax.random.normal(jax.random.fold_in(k_x, batch), (batch, IN_DIM), jnp.float32)
        out = jax.block_until_ready(representation_transformation(x, prepped))
        assert out.shape == (batch, NUM_CLASSES)
        assert jnp.allclose(out, _reference_bf16(x, params), atol=1e-2, rtol=1e-2), \
            f"mismatch vs bf16-mirror reference (batch={batch})"
        assert jnp.allclose(out, _reference_f32(x, params), atol=5e-2, rtol=5e-2), \
            f"mismatch vs f32 reference (batch={batch})"

    print("KERNEL_OK")
</pallas_src>

<mosaic_0001>
module attributes {stable_mosaic.version = 11 : i64} {
  func.func @_mlp_kernel(%arg0: i32, %arg1: memref<8x352xf32, #tpu.memory_space<vmem>>, %arg2: memref<352x384xbf16, #tpu.memory_space<vmem>>, %arg3: memref<1x384xf32, #tpu.memory_space<vmem>>, %arg4: memref<384x192xbf16, #tpu.memory_space<vmem>>, %arg5: memref<1x192xf32, #tpu.memory_space<vmem>>, %arg6: memref<192x128xbf16, #tpu.memory_space<vmem>>, %arg7: memref<1x128xf32, #tpu.memory_space<vmem>>, %arg8: memref<8x128xbf16, #tpu.memory_space<vmem>>) attributes {dimension_semantics = [#tpu.dimension_semantics<parallel>], iteration_bounds = array<i64: 1>, scalar_prefetch = 0 : i64, scratch_operands = 0 : i64, tpu.core_type = #tpu.core_type<tc>, window_params = [{transform_indices = @transform_0, window_bounds = array<i64: 8, 352>}, {pipeline_mode = #tpu.pipeline_mode<synchronous>, transform_indices = @transform_1, window_bounds = array<i64: 352, 384>}, {pipeline_mode = #tpu.pipeline_mode<synchronous>, transform_indices = @transform_2, window_bounds = array<i64: 1, 384>}, {pipeline_mode = #tpu.pipeline_mode<synchronous>, transform_indices = @transform_3, window_bounds = array<i64: 384, 192>}, {pipeline_mode = #tpu.pipeline_mode<synchronous>, transform_indices = @transform_4, window_bounds = array<i64: 1, 192>}, {pipeline_mode = #tpu.pipeline_mode<synchronous>, transform_indices = @transform_5, window_bounds = array<i64: 192, 128>}, {pipeline_mode = #tpu.pipeline_mode<synchronous>, transform_indices = @transform_6, window_bounds = array<i64: 1, 128>}, {transform_indices = @transform_7, window_bounds = array<i64: 8, 128>}]} {
    %c0 = arith.constant 0 : index
    %c0_0 = arith.constant 0 : index
    %0 = vector.load %arg1[%c0, %c0_0] : memref<8x352xf32, #tpu.memory_space<vmem>>, vector<8x352xf32>
    %1 = arith.truncf %0 : vector<8x352xf32> to vector<8x352xbf16>
    %c0_1 = arith.constant 0 : index
    %c0_2 = arith.constant 0 : index
    %2 = vector.load %arg2[%c0_1, %c0_2] : memref<352x384xbf16, #tpu.memory_space<vmem>>, vector<352x384xbf16>
    %cst = arith.constant dense<0.000000e+00> : vector<8x384xf32>
    %3 = tpu.matmul %1, %2, %cst {dimension_numbers = #tpu.dot_dimension_numbers<[1], [0], [0], [1], [0, 0, 1, 1], [], []>} : vector<8x352xbf16>, vector<352x384xbf16>, vector<8x384xf32> -> vector<8x384xf32>
    %c0_3 = arith.constant 0 : index
    %c0_4 = arith.constant 0 : index
    %4 = vector.load %arg3[%c0_3, %c0_4] : memref<1x384xf32, #tpu.memory_space<vmem>>, vector<1x384xf32>
    %5 = vector.broadcast %4 : vector<1x384xf32> to vector<8x384xf32>
    %6 = arith.addf %3, %5 : vector<8x384xf32>
    %cst_5 = arith.constant 0.000000e+00 : f32
    %7 = vector.broadcast %cst_5 : f32 to vector<8x384xf32>
    %8 = arith.maximumf %6, %7 : vector<8x384xf32>
    %9 = arith.truncf %8 : vector<8x384xf32> to vector<8x384xbf16>
    %c0_6 = arith.constant 0 : index
    %c0_7 = arith.constant 0 : index
    %10 = vector.load %arg4[%c0_6, %c0_7] : memref<384x192xbf16, #tpu.memory_space<vmem>>, vector<384x192xbf16>
    %cst_8 = arith.constant dense<0.000000e+00> : vector<8x192xf32>
    %11 = tpu.matmul %9, %10, %cst_8 {dimension_numbers = #tpu.dot_dimension_numbers<[1], [0], [0], [1], [0, 0, 1, 1], [], []>} : vector<8x384xbf16>, vector<384x192xbf16>, vector<8x192xf32> -> vector<8x192xf32>
    %c0_9 = arith.constant 0 : index
    %c0_10 = arith.constant 0 : index
    %12 = vector.load %arg5[%c0_9, %c0_10] : memref<1x192xf32, #tpu.memory_space<vmem>>, vector<1x192xf32>
    %13 = vector.broadcast %12 : vector<1x192xf32> to vector<8x192xf32>
    %14 = arith.addf %11, %13 : vector<8x192xf32>
    %cst_11 = arith.constant 0.000000e+00 : f32
    %15 = vector.broadcast %cst_11 : f32 to vector<8x192xf32>
    %16 = arith.maximumf %14, %15 : vector<8x192xf32>
    %17 = arith.truncf %16 : vector<8x192xf32> to vector<8x192xbf16>
    %c0_12 = arith.constant 0 : index
    %c0_13 = arith.constant 0 : index
    %18 = vector.load %arg6[%c0_12, %c0_13] : memref<192x128xbf16, #tpu.memory_space<vmem>>, vector<192x128xbf16>
    %cst_14 = arith.constant dense<0.000000e+00> : vector<8x128xf32>
    %19 = tpu.matmul %17, %18, %cst_14 {dimension_numbers = #tpu.dot_dimension_numbers<[1], [0], [0], [1], [0, 0, 1, 1], [], []>} : vector<8x192xbf16>, vector<192x128xbf16>, vector<8x128xf32> -> vector<8x128xf32>
    %c0_15 = arith.constant 0 : index
    %c0_16 = arith.constant 0 : index
    %20 = vector.load %arg7[%c0_15, %c0_16] : memref<1x128xf32, #tpu.memory_space<vmem>>, vector<1x128xf32>
    %21 = vector.broadcast %20 : vector<1x128xf32> to vector<8x128xf32>
    %22 = arith.addf %19, %21 : vector<8x128xf32>
    %23 = arith.truncf %22 : vector<8x128xf32> to vector<8x128xbf16>
    %c0_17 = arith.constant 0 : index
    %c0_18 = arith.constant 0 : index
    %24 = vector.load %arg8[%c0_17, %c0_18] : memref<8x128xbf16, #tpu.memory_space<vmem>>, vector<8x128xbf16>
    tpu.vector_store %arg8[%c0_17, %c0_18], %23 {strides = array<i32>} : memref<8x128xbf16, #tpu.memory_space<vmem>>, vector<8x128xbf16>,
    return
  }
  func.func @transform_0(%arg0: i32) -> (i32, i32) {
    %c0_i32 = arith.constant 0 : i32
    %c0_i32_0 = arith.constant 0 : i32
    return %arg0, %c0_i32 : i32, i32
  }
  func.func @transform_1(%arg0: i32) -> (i32, i32) {
    %c0_i32 = arith.constant 0 : i32
    %c0_i32_0 = arith.constant 0 : i32
    %c0_i32_1 = arith.constant 0 : i32
    return %c0_i32, %c0_i32_0 : i32, i32
  }
  func.func @transform_2(%arg0: i32) -> (i32, i32) {
    %c0_i32 = arith.constant 0 : i32
    %c0_i32_0 = arith.constant 0 : i32
    %c0_i32_1 = arith.constant 0 : i32
    return %c0_i32, %c0_i32_0 : i32, i32
  }
  func.func @transform_3(%arg0: i32) -> (i32, i32) {
    %c0_i32 = arith.constant 0 : i32
    %c0_i32_0 = arith.constant 0 : i32
    %c0_i32_1 = arith.constant 0 : i32
    return %c0_i32, %c0_i32_0 : i32, i32
  }
  func.func @transform_4(%arg0: i32) -> (i32, i32) {
    %c0_i32 = arith.constant 0 : i32
    %c0_i32_0 = arith.constant 0 : i32
    %c0_i32_1 = arith.constant 0 : i32
    return %c0_i32, %c0_i32_0 : i32, i32
  }
  func.func @transform_5(%arg0: i32) -> (i32, i32) {
    %c0_i32 = arith.constant 0 : i32
    %c0_i32_0 = arith.constant 0 : i32
    %c0_i32_1 = arith.constant 0 : i32
    return %c0_i32, %c0_i32_0 : i32, i32
  }
  func.func @transform_6(%arg0: i32) -> (i32, i32) {
    %c0_i32 = arith.constant 0 : i32
    %c0_i32_0 = arith.constant 0 : i32
    %c0_i32_1 = arith.constant 0 : i32
    return %c0_i32, %c0_i32_0 : i32, i32
  }
  func.func @transform_7(%arg0: i32) -> (i32, i32) {
    %c0_i32 = arith.constant 0 : i32
    %c0_i32_0 = arith.constant 0 : i32
    return %arg0, %c0_i32 : i32, i32
  }
}

module attributes {stable_mosaic.version = 11 : i64} {
  func.func @_mlp_kernel(%arg0: i32, %arg1: memref<8x352xf32, #tpu.memory_space<vmem>>, %arg2: memref<352x384xbf16, #tpu.memory_space<vmem>>, %arg3: memref<1x384xf32, #tpu.memory_space<vmem>>, %arg4: memref<384x192xbf16, #tpu.memory_space<vmem>>, %arg5: memref<1x192xf32, #tpu.memory_space<vmem>>, %arg6: memref<192x128xbf16, #tpu.memory_space<vmem>>, %arg7: memref<1x128xf32, #tpu.memory_space<vmem>>, %arg8: memref<8x128xbf16, #tpu.memory_space<vmem>>) attributes {dimension_semantics = [#tpu.dimension_semantics<parallel>], iteration_bounds = array<i64: 1>, scalar_prefetch = 0 : i64, scratch_operands = 0 : i64, tpu.core_type = #tpu.core_type<tc>, window_params = [{transform_indices = @transform_0, window_bounds = array<i64: 8, 352>}, {pipeline_mode = #tpu.pipeline_mode<synchronous>, transform_indices = @transform_1, window_bounds = array<i64: 352, 384>}, {pipeline_mode = #tpu.pipeline_mode<synchronous>, transform_indices = @transform_2, window_bounds = array<i64: 1, 384>}, {pipeline_mode = #tpu.pipeline_mode<synchronous>, transform_indices = @transform_3, window_bounds = array<i64: 384, 192>}, {pipeline_mode = #tpu.pipeline_mode<synchronous>, transform_indices = @transform_4, window_bounds = array<i64: 1, 192>}, {pipeline_mode = #tpu.pipeline_mode<synchronous>, transform_indices = @transform_5, window_bounds = array<i64: 192, 128>}, {pipeline_mode = #tpu.pipeline_mode<synchronous>, transform_indices = @transform_6, window_bounds = array<i64: 1, 128>}, {transform_indices = @transform_7, window_bounds = array<i64: 8, 128>}]} {
    %c0 = arith.constant 0 : index
    %c0_0 = arith.constant 0 : index
    %0 = vector.load %arg1[%c0, %c0_0] : memref<8x352xf32, #tpu.memory_space<vmem>>, vector<8x352xf32>
    %1 = arith.truncf %0 : vector<8x352xf32> to vector<8x352xbf16>
    %c0_1 = arith.constant 0 : index
    %c0_2 = arith.constant 0 : index
    %2 = vector.load %arg2[%c0_1, %c0_2] : memref<352x384xbf16, #tpu.memory_space<vmem>>, vector<352x384xbf16>
    %cst = arith.constant dense<0.000000e+00> : vector<8x384xf32>
    %3 = tpu.matmul %1, %2, %cst {dimension_numbers = #tpu.dot_dimension_numbers<[1], [0], [0], [1], [0, 0, 1, 1], [], []>} : vector<8x352xbf16>, vector<352x384xbf16>, vector<8x384xf32> -> vector<8x384xf32>
    %c0_3 = arith.constant 0 : index
    %c0_4 = arith.constant 0 : index
    %4 = vector.load %arg3[%c0_3, %c0_4] : memref<1x384xf32, #tpu.memory_space<vmem>>, vector<1x384xf32>
    %5 = vector.broadcast %4 : vector<1x384xf32> to vector<8x384xf32>
    %6 = arith.addf %3, %5 : vector<8x384xf32>
    %cst_5 = arith.constant 0.000000e+00 : f32
    %7 = vector.broadcast %cst_5 : f32 to vector<8x384xf32>
    %8 = arith.maximumf %6, %7 : vector<8x384xf32>
    %9 = arith.truncf %8 : vector<8x384xf32> to vector<8x384xbf16>
    %c0_6 = arith.constant 0 : index
    %c0_7 = arith.constant 0 : index
    %10 = vector.load %arg4[%c0_6, %c0_7] : memref<384x192xbf16, #tpu.memory_space<vmem>>, vector<384x192xbf16>
    %cst_8 = arith.constant dense<0.000000e+00> : vector<8x192xf32>
    %11 = tpu.matmul %9, %10, %cst_8 {dimension_numbers = #tpu.dot_dimension_numbers<[1], [0], [0], [1], [0, 0, 1, 1], [], []>} : vector<8x384xbf16>, vector<384x192xbf16>, vector<8x192xf32> -> vector<8x192xf32>
    %c0_9 = arith.constant 0 : index
    %c0_10 = arith.constant 0 : index
    %12 = vector.load %arg5[%c0_9, %c0_10] : memref<1x192xf32, #tpu.memory_space<vmem>>, vector<1x192xf32>
    %13 = vector.broadcast %12 : vector<1x192xf32> to vector<8x192xf32>
    %14 = arith.addf %11, %13 : vector<8x192xf32>
    %cst_11 = arith.constant 0.000000e+00 : f32
    %15 = vector.broadcast %cst_11 : f32 to vector<8x192xf32>
    %16 = arith.maximumf %14, %15 : vector<8x192xf32>
    %17 = arith.truncf %16 : vector<8x192xf32> to vector<8x192xbf16>
    %c0_12 = arith.constant 0 : index
    %c0_13 = arith.constant 0 : index
    %18 = vector.load %arg6[%c0_12, %c0_13] : memref<192x128xbf16, #tpu.memory_space<vmem>>, vector<192x128xbf16>
    %cst_14 = arith.constant dense<0.000000e+00> : vector<8x128xf32>
    %19 = tpu.matmul %17, %18, %cst_14 {dimension_numbers = #tpu.dot_dimension_numbers<[1], [0], [0], [1], [0, 0, 1, 1], [], []>} : vector<8x192xbf16>, vector<192x128xbf16>, vector<8x128xf32> -> vector<8x128xf32>
    %c0_15 = arith.constant 0 : index
    %c0_16 = arith.constant 0 : index
    %20 = vector.load %arg7[%c0_15, %c0_16] : memref<1x128xf32, #tpu.memory_space<vmem>>, vector<1x128xf32>
    %21 = vector.broadcast %20 : vector<1x128xf32> to vector<8x128xf32>
    %22 = arith.addf %19, %21 : vector<8x128xf32>
    %23 = arith.truncf %22 : vector<8x128xf32> to vector<8x128xbf16>
    %c0_17 = arith.constant 0 : index
    %c0_18 = arith.constant 0 : index
    %24 = vector.load %arg8[%c0_17, %c0_18] : memref<8x128xbf16, #tpu.memory_space<vmem>>, vector<8x128xbf16>
    tpu.vector_store %arg8[%c0_17, %c0_18], %23 {strides = array<i32>} : memref<8x128xbf16, #tpu.memory_space<vmem>>, vector<8x128xbf16>,
    return
  }
  func.func @transform_0(%arg0: i32) -> (i32, i32) {
    %c0_i32 = arith.constant 0 : i32
    %c0_i32_0 = arith.constant 0 : i32
    return %arg0, %c0_i32 : i32, i32
  }
  func.func @transform_1(%arg0: i32) -> (i32, i32) {
    %c0_i32 = arith.constant 0 : i32
    %c0_i32_0 = arith.constant 0 : i32
    %c0_i32_1 = arith.constant 0 : i32
    return %c0_i32, %c0_i32_0 : i32, i32
  }
  func.func @transform_2(%arg0: i32) -> (i32, i32) {
    %c0_i32 = arith.constant 0 : i32
    %c0_i32_0 = arith.constant 0 : i32
    %c0_i32_1 = arith.constant 0 : i32
    return %c0_i32, %c0_i32_0 : i32, i32
  }
  func.func @transform_3(%arg0: i32) -> (i32, i32) {
    %c0_i32 = arith.constant 0 : i32
    %c0_i32_0 = arith.constant 0 : i32
    %c0_i32_1 = arith.constant 0 : i32
    return %c0_i32, %c0_i32_0 : i32, i32
  }
  func.func @transform_4(%arg0: i32) -> (i32, i32) {
    %c0_i32 = arith.constant 0 : i32
    %c0_i32_0 = arith.constant 0 : i32
    %c0_i32_1 = arith.constant 0 : i32
    return %c0_i32, %c0_i32_0 : i32, i32
  }
  func.func @transform_5(%arg0: i32) -> (i32, i32) {
    %c0_i32 = arith.constant 0 : i32
    %c0_i32_0 = arith.constant 0 : i32
    %c0_i32_1 = arith.constant 0 : i32
    return %c0_i32, %c0_i32_0 : i32, i32
  }
  func.func @transform_6(%arg0: i32) -> (i32, i32) {
    %c0_i32 = arith.constant 0 : i32
    %c0_i32_0 = arith.constant 0 : i32
    %c0_i32_1 = arith.constant 0 : i32
    return %c0_i32, %c0_i32_0 : i32, i32
  }
  func.func @transform_7(%arg0: i32) -> (i32, i32) {
    %c0_i32 = arith.constant 0 : i32
    %c0_i32_0 = arith.constant 0 : i32
    return %arg0, %c0_i32 : i32, i32
  }
}

</mosaic_0001>

<llo_original>
// kernel: tpu_custom_call.1
$region0: #{tpu_custom_call.1}
  #allocation0 [shape = 'u32[]', space=smem, size = 0x4, offset = 0x4, fixed_abs, tag = 'smem constant byte address 0x4 - core index']
  #allocation1 [shape = 'u32[144,128]{1,0:T(1,128)}', space=vmem, size = 0x12000, scoped, tag = 'internal scratch']
  %s0 = inlined_call_operand.vmem [shape: f32[8,352], index: 0, kind: input, shape index: {}]
  %s1 = inlined_call_operand.vmem [shape: bf16[352,384], index: 1, kind: input, shape index: {}]
  %s2 = inlined_call_operand.vmem [shape: f32[1,384], index: 2, kind: input, shape index: {}]
  %s3 = inlined_call_operand.vmem [shape: bf16[384,192], index: 3, kind: input, shape index: {}]
  %s4 = inlined_call_operand.vmem [shape: f32[1,192], index: 4, kind: input, shape index: {}]
  %s5 = inlined_call_operand.vmem [shape: bf16[192,128], index: 5, kind: input, shape index: {}]
  %s6 = inlined_call_operand.vmem [shape: f32[1,128], index: 6, kind: input, shape index: {}]
  %s7 = inlined_call_operand.hbm [shape: bf16[8,128], index: 7, kind: output, shape index: {}]
  %s8 = sld [smem:[#allocation0]]
  $region38: #{tpu_custom_call.1} parent=0
    _
  %s10 = ssub.s32 1, %s8
  %s11 = scalar_select 0, %s10, %s8
  $region1: #{tpu_custom_call.1} parent=0
    #allocation2 [shape = 'u8[2048]{0}', space=vmem, size = 0x800, scoped, tag = 'output window, operand 0, single buffered']
    #allocation3 [shape = 's32[1]{0}', space=sflag, size = 0x4, scoped, tag = 'scoped memory for tpu_custom_call.1']
    %12 = vsyncpa [#allocation3], 0
    // Predicated region
    $region2: #{tpu_custom_call.1} parent=1 // pred_check
      _
    $region3: #{tpu_custom_call.1} parent=1 // pred_check_branch
      %14 = sbr.rel (0) target = $region5
    $region4: #{tpu_custom_call.1} parent=1 // pred_region
      _
    $region5: #{tpu_custom_call.1} parent=1 // pred_fallthru
      _
    // Predicated region
    $region6: #{tpu_custom_call.1} parent=1 // pred_check
      _
    $region7: #{tpu_custom_call.1} parent=1 // pred_check_branch
      %16 = sbr.rel (0) target = $region9
    $region8: #{tpu_custom_call.1} parent=1 // pred_region
      _
    $region9: #{tpu_custom_call.1} parent=1 // pred_fallthru
      _
    // Predicated region
    $region10: #{tpu_custom_call.1} parent=1 // pred_check
      _
    $region11: #{tpu_custom_call.1} parent=1 // pred_check_branch
      %18 = sbr.rel (0) target = $region13
    $region12: #{tpu_custom_call.1} parent=1 // pred_region
      _
    $region13: #{tpu_custom_call.1} parent=1 // pred_fallthru
      _
    // Predicated region
    $region14: #{tpu_custom_call.1} parent=1 // pred_check
      _
    $region15: #{tpu_custom_call.1} parent=1 // pred_check_branch
      %20 = sbr.rel (0) target = $region17
    $region16: #{tpu_custom_call.1} parent=1 // pred_region
      _
    $region17: #{tpu_custom_call.1} parent=1 // pred_fallthru
      _
    // Predicated region
    $region18: #{tpu_custom_call.1} parent=1 // pred_check
      _
    $region19: #{tpu_custom_call.1} parent=1 // pred_check_branch
      %22 = sbr.rel (0) target = $region21
    $region20: #{tpu_custom_call.1} parent=1 // pred_region
      _
    $region21: #{tpu_custom_call.1} parent=1 // pred_fallthru
      _
    // Predicated region
    $region22: #{tpu_custom_call.1} parent=1 // pred_check
      _
    $region23: #{tpu_custom_call.1} parent=1 // pred_check_branch
      %24 = sbr.rel (0) target = $region25
    $region24: #{tpu_custom_call.1} parent=1 // pred_region
      _
    $region25: #{tpu_custom_call.1} parent=1 // pred_fallthru
      _
    // Predicated region
    $region26: #{tpu_custom_call.1} parent=1 // pred_check
      _
    $region27: #{tpu_custom_call.1} parent=1 // pred_check_branch
      %26 = sbr.rel (0) target = $region29
    $region28: #{tpu_custom_call.1} parent=1 // pred_region
      _
    $region29: #{tpu_custom_call.1} parent=1 // pred_fallthru
      _
    %v28 = vld [vmem:[%s0] sm:$0xff]
    %v29 = vld [vmem:[%s0 + $0x8] sm:$0xff]
    %v30 = vld [vmem:[%s0 + $0x10] sm:$0xff]
    %v31 = vpack.c.bf16 %v28, %v28
    %v32 = vpack.c.bf16 %v29, %v29
    %v33 = vpack.c.bf16 %v30, %v30
    %v34 = vld [vmem:[%s1] sm:$0xff]
    %v35 = vld [vmem:[%s1 + $0x8] sm:$0xf]
    %v36 = vld [vmem:[%s1 + $0xc] sm:$0xff]
    %v37 = vld [vmem:[%s1 + $0x14] sm:$0xf]
    %v38 = vld [vmem:[%s1 + $0x18] sm:$0xff]
    %v39 = vld [vmem:[%s1 + $0x20] sm:$0xf]
    %v40 = vld [vmem:[%s1 + $0x24] sm:$0xff]
    %v41 = vld [vmem:[%s1 + $0x2c] sm:$0xf]
    %v42 = vld [vmem:[%s1 + $0x30] sm:$0xff]
    %v43 = vld [vmem:[%s1 + $0x38] sm:$0xf]
    %v44 = vld [vmem:[%s1 + $0x3c] sm:$0xff]
    %v45 = vld [vmem:[%s1 + $0x44] sm:$0xf]
    %v46 = vld [vmem:[%s1 + $0x48] sm:$0xff]
    %v47 = vld [vmem:[%s1 + $0x50] sm:$0xf]
    %v48 = vld [vmem:[%s1 + $0x54] sm:$0xff]
    %v49 = vld [vmem:[%s1 + $0x5c] sm:$0xf]
    %v50 = vld [vmem:[%s1 + $0x60] sm:$0xff]
    %v51 = vld [vmem:[%s1 + $0x68] sm:$0xf]
    %v52 = vld [vmem:[%s1 + $0x6c] sm:$0xff]
    %v53 = vld [vmem:[%s1 + $0x74] sm:$0xf]
    %v54 = vld [vmem:[%s1 + $0x78] sm:$0xff]
    %v55 = vld [vmem:[%s1 + $0x80] sm:$0xf]
    %v56 = vld [vmem:[%s1 + $0x84] sm:$0xff]
    %v57 = vld [vmem:[%s1 + $0x8c] sm:$0xf]
    %v58 = vld [vmem:[%s1 + $0x90] sm:$0xff]
    %v59 = vld [vmem:[%s1 + $0x98] sm:$0xf]
    %v60 = vld [vmem:[%s1 + $0x9c] sm:$0xff]
    %v61 = vld [vmem:[%s1 + $0xa4] sm:$0xf]
    %v62 = vld [vmem:[%s1 + $0xa8] sm:$0xff]
    %v63 = vld [vmem:[%s1 + $0xb0] sm:$0xf]
    %v64 = vld [vmem:[%s1 + $0xb4] sm:$0xff]
    %v65 = vld [vmem:[%s1 + $0xbc] sm:$0xf]
    %v66 = vld [vmem:[%s1 + $0xc0] sm:$0xff]
    %v67 = vld [vmem:[%s1 + $0xc8] sm:$0xf]
    %v68 = vld [vmem:[%s1 + $0xcc] sm:$0xff]
    %v69 = vld [vmem:[%s1 + $0xd4] sm:$0xf]
    %v70 = vld [vmem:[%s1 + $0xd8] sm:$0xff]
    %v71 = vld [vmem:[%s1 + $0xe0] sm:$0xf]
    %v72 = vld [vmem:[%s1 + $0xe4] sm:$0xff]
    %v73 = vld [vmem:[%s1 + $0xec] sm:$0xf]
    %v74 = vld [vmem:[%s1 + $0xf0] sm:$0xff]
    %v75 = vld [vmem:[%s1 + $0xf8] sm:$0xf]
    %v76 = vld [vmem:[%s1 + $0xfc] sm:$0xff]
    %v77 = vld [vmem:[%s1 + $0x104] sm:$0xf]
    %v78 = vld [vmem:[%s1 + $0x108] sm:$0xff]
    %v79 = vld [vmem:[%s1 + $0x110] sm:$0xf]
    %v80 = vld [vmem:[%s1 + $0x114] sm:$0xff]
    %v81 = vld [vmem:[%s1 + $0x11c] sm:$0xf]
    %v82 = vld [vmem:[%s1 + $0x120] sm:$0xff]
    %v83 = vld [vmem:[%s1 + $0x128] sm:$0xf]
    %v84 = vld [vmem:[%s1 + $0x12c] sm:$0xff]
    %v85 = vld [vmem:[%s1 + $0x134] sm:$0xf]
    %v86 = vld [vmem:[%s1 + $0x138] sm:$0xff]
    %v87 = vld [vmem:[%s1 + $0x140] sm:$0xf]
    %v88 = vld [vmem:[%s1 + $0x144] sm:$0xff]
    %v89 = vld [vmem:[%s1 + $0x14c] sm:$0xf]
    %v90 = vld [vmem:[%s1 + $0x150] sm:$0xff]
    %v91 = vld [vmem:[%s1 + $0x158] sm:$0xf]
    %v92 = vld [vmem:[%s1 + $0x15c] sm:$0xff]
    %v93 = vld [vmem:[%s1 + $0x164] sm:$0xf]
    %v94 = vld [vmem:[%s1 + $0x168] sm:$0xff]
    %v95 = vld [vmem:[%s1 + $0x170] sm:$0xf]
    %v96 = vld [vmem:[%s1 + $0x174] sm:$0xff]
    %v97 = vld [vmem:[%s1 + $0x17c] sm:$0xf]
    %v98 = vld [vmem:[%s1 + $0x180] sm:$0xff]
    %v99 = vld [vmem:[%s1 + $0x188] sm:$0xf]
    %v100 = vld [vmem:[%s1 + $0x18c] sm:$0xff]
    %v101 = vld [vmem:[%s1 + $0x194] sm:$0xf]
    %v102 = vld [vmem:[%s1 + $0x198] sm:$0xff]
    %v103 = vld [vmem:[%s1 + $0x1a0] sm:$0xf]
    %v104 = vld [vmem:[%s1 + $0x1a4] sm:$0xff]
    %v105 = vld [vmem:[%s1 + $0x1ac] sm:$0xf]
    %v106 = vld [vmem:[%s1 + $0x1b0] sm:$0xff]
    %v107 = vld [vmem:[%s1 + $0x1b8] sm:$0xf]
    %v108 = vld [vmem:[%s1 + $0x1bc] sm:$0xff]
    %v109 = vld [vmem:[%s1 + $0x1c4] sm:$0xf]
    %v110 = vld [vmem:[%s1 + $0x1c8] sm:$0xff]
    %v111 = vld [vmem:[%s1 + $0x1d0] sm:$0xf]
    %v112 = vld [vmem:[%s1 + $0x1d4] sm:$0xff]
    %v113 = vld [vmem:[%s1 + $0x1dc] sm:$0xf]
    %v114 = vld [vmem:[%s1 + $0x1e0] sm:$0xff]
    %v115 = vld [vmem:[%s1 + $0x1e8] sm:$0xf]
    %v116 = vld [vmem:[%s1 + $0x1ec] sm:$0xff]
    %v117 = vld [vmem:[%s1 + $0x1f4] sm:$0xf]
    %v118 = vld [vmem:[%s1 + $0x1f8] sm:$0xff]
    %v119 = vld [vmem:[%s1 + $0x200] sm:$0xf]
    %v120 = vld [vmem:[%s1 + $0x204] sm:$0xff]
    %v121 = vld [vmem:[%s1 + $0x20c] sm:$0xf]
    %v122 = vld [vmem:[%s2] sm:$0x7]
    %v124 = vlaneseq
    %v125 = vshrl.u32 %v124, 7
    %v126 = vsub.s32 0, %v125
    %v127 = vrot.slane %v122, %v126
    %v128 = vlaneseq
    %v129 = vshrl.u32 %v128, 7
    %v130 = vsub.s32 1, %v129
    %v131 = vrot.slane %v122, %v130
    %v132 = vlaneseq
    %v133 = vshrl.u32 %v132, 7
    %v134 = vsub.s32 2, %v133
    %v135 = vrot.slane %v122, %v134
    %v227 = vunpack.c.l.b16 %v34
    %v228 = vunpack.c.h.b16 %v34
    %v229 = vunpack.c.l.b16 %v35
    %v230 = vunpack.c.l.b16 %v36
    %v231 = vunpack.c.h.b16 %v36
    %v232 = vunpack.c.l.b16 %v37
    %v233 = vunpack.c.l.b16 %v38
    %v234 = vunpack.c.h.b16 %v38
    %v235 = vunpack.c.l.b16 %v39
    %v236 = vunpack.c.l.b16 %v40
    %v237 = vunpack.c.h.b16 %v40
    %v238 = vunpack.c.l.b16 %v41
    %v239 = vunpack.c.l.b16 %v42
    %v240 = vunpack.c.h.b16 %v42
    %v241 = vunpack.c.l.b16 %v43
    %v242 = vunpack.c.l.b16 %v44
    %v243 = vunpack.c.h.b16 %v44
    %v244 = vunpack.c.l.b16 %v45
    %v245 = vunpack.c.l.b16 %v46
    %v246 = vunpack.c.h.b16 %v46
    %v247 = vunpack.c.l.b16 %v47
    %v248 = vunpack.c.l.b16 %v48
    %v249 = vunpack.c.h.b16 %v48
    %v250 = vunpack.c.l.b16 %v49
    %v251 = vunpack.c.l.b16 %v50
    %v252 = vunpack.c.h.b16 %v50
    %v253 = vunpack.c.l.b16 %v51
    %v254 = vunpack.c.l.b16 %v52
    %v255 = vunpack.c.h.b16 %v52
    %v256 = vunpack.c.l.b16 %v53
    %v257 = vunpack.c.l.b16 %v54
    %v258 = vunpack.c.h.b16 %v54
    %v259 = vunpack.c.l.b16 %v55
    %v260 = vunpack.c.l.b16 %v56
    %v261 = vunpack.c.h.b16 %v56
    %v262 = vunpack.c.l.b16 %v57
    %v263 = vunpack.c.l.b16 %v58
    %v264 = vunpack.c.h.b16 %v58
    %v265 = vunpack.c.l.b16 %v59
    %v266 = vunpack.c.l.b16 %v60
    %v267 = vunpack.c.h.b16 %v60
    %v268 = vunpack.c.l.b16 %v61
    %v269 = vunpack.c.l.b16 %v62
    %v270 = vunpack.c.h.b16 %v62
    %v271 = vunpack.c.l.b16 %v63
    %v272 = vunpack.c.l.b16 %v64
    %v273 = vunpack.c.h.b16 %v64
    %v274 = vunpack.c.l.b16 %v65
    %v275 = vunpack.c.l.b16 %v66
    %v276 = vunpack.c.h.b16 %v66
    %v277 = vunpack.c.l.b16 %v67
    %v278 = vunpack.c.l.b16 %v68
    %v279 = vunpack.c.h.b16 %v68
    %v280 = vunpack.c.l.b16 %v69
    %v281 = vunpack.c.l.b16 %v70
    %v282 = vunpack.c.h.b16 %v70
    %v283 = vunpack.c.l.b16 %v71
    %v284 = vunpack.c.l.b16 %v72
    %v285 = vunpack.c.h.b16 %v72
    %v286 = vunpack.c.l.b16 %v73
    %v287 = vunpack.c.l.b16 %v74
    %v288 = vunpack.c.h.b16 %v74
    %v289 = vunpack.c.l.b16 %v75
    %v290 = vunpack.c.l.b16 %v76
    %v291 = vunpack.c.h.b16 %v76
    %v292 = vunpack.c.l.b16 %v77
    %v293 = vunpack.c.l.b16 %v78
    %v294 = vunpack.c.h.b16 %v78
    %v295 = vunpack.c.l.b16 %v79
    %v296 = vunpack.c.l.b16 %v80
    %v297 = vunpack.c.h.b16 %v80
    %v298 = vunpack.c.l.b16 %v81
    %v299 = vunpack.c.l.b16 %v82
    %v300 = vunpack.c.h.b16 %v82
    %v301 = vunpack.c.l.b16 %v83
    %v302 = vunpack.c.l.b16 %v84
    %v303 = vunpack.c.h.b16 %v84
    %v304 = vunpack.c.l.b16 %v85
    %v305 = vunpack.c.l.b16 %v86
    %v306 = vunpack.c.h.b16 %v86
    %v307 = vunpack.c.l.b16 %v87
    %v308 = vunpack.c.l.b16 %v88
    %v309 = vunpack.c.h.b16 %v88
    %v310 = vunpack.c.l.b16 %v89
    %v311 = vunpack.c.l.b16 %v90
    %v312 = vunpack.c.h.b16 %v90
    %v313 = vunpack.c.l.b16 %v91
    %v314 = vunpack.c.l.b16 %v92
    %v315 = vunpack.c.h.b16 %v92
    %v316 = vunpack.c.l.b16 %v93
    %v317 = vunpack.c.l.b16 %v94
    %v318 = vunpack.c.h.b16 %v94
    %v319 = vunpack.c.l.b16 %v95
    %v320 = vunpack.c.l.b16 %v96
    %v321 = vunpack.c.h.b16 %v96
    %v322 = vunpack.c.l.b16 %v97
    %v323 = vunpack.c.l.b16 %v98
    %v324 = vunpack.c.h.b16 %v98
    %v325 = vunpack.c.l.b16 %v99
    %v326 = vunpack.c.l.b16 %v100
    %v327 = vunpack.c.h.b16 %v100
    %v328 = vunpack.c.l.b16 %v101
    %v329 = vunpack.c.l.b16 %v102
    %v330 = vunpack.c.h.b16 %v102
    %v331 = vunpack.c.l.b16 %v103
    %v332 = vunpack.c.l.b16 %v104
    %v333 = vunpack.c.h.b16 %v104
    %v334 = vunpack.c.l.b16 %v105
    %v335 = vunpack.c.l.b16 %v106
    %v336 = vunpack.c.h.b16 %v106
    %v337 = vunpack.c.l.b16 %v107
    %v338 = vunpack.c.l.b16 %v108
    %v339 = vunpack.c.h.b16 %v108
    %v340 = vunpack.c.l.b16 %v109
    %v341 = vunpack.c.l.b16 %v110
    %v342 = vunpack.c.h.b16 %v110
    %v343 = vunpack.c.l.b16 %v111
    %v344 = vunpack.c.l.b16 %v112
    %v345 = vunpack.c.h.b16 %v112
    %v346 = vunpack.c.l.b16 %v113
    %v347 = vunpack.c.l.b16 %v114
    %v348 = vunpack.c.h.b16 %v114
    %v349 = vunpack.c.l.b16 %v115
    %v350 = vunpack.c.l.b16 %v116
    %v351 = vunpack.c.h.b16 %v116
    %v352 = vunpack.c.l.b16 %v117
    %v353 = vunpack.c.l.b16 %v118
    %v354 = vunpack.c.h.b16 %v118
    %v355 = vunpack.c.l.b16 %v119
    %v356 = vunpack.c.l.b16 %v120
    %v357 = vunpack.c.h.b16 %v120
    %v358 = vunpack.c.l.b16 %v121
    %v359 = vpack.c.b16 %v230, %v227
    %v360 = vpack.c.b16 %v231, %v228
    %v361 = vpack.c.b16 %v232, %v229
    %v362 = vpack.c.b16 %v236, %v233
    %v363 = vpack.c.b16 %v237, %v234
    %v364 = vpack.c.b16 %v238, %v235
    %v365 = vpack.c.b16 %v242, %v239
    %v366 = vpack.c.b16 %v243, %v240
    %v367 = vpack.c.b16 %v244, %v241
    %v368 = vpack.c.b16 %v248, %v245
    %v369 = vpack.c.b16 %v249, %v246
    %v370 = vpack.c.b16 %v250, %v247
    %v371 = vpack.c.b16 %v254, %v251
    %v372 = vpack.c.b16 %v255, %v252
    %v373 = vpack.c.b16 %v256, %v253
    %v374 = vpack.c.b16 %v260, %v257
    %v375 = vpack.c.b16 %v261, %v258
    %v376 = vpack.c.b16 %v262, %v259
    %v377 = vpack.c.b16 %v266, %v263
    %v378 = vpack.c.b16 %v267, %v264
    %v379 = vpack.c.b16 %v268, %v265
    %v380 = vpack.c.b16 %v272, %v269
    %v381 = vpack.c.b16 %v273, %v270
    %v382 = vpack.c.b16 %v274, %v271
    %v383 = vpack.c.b16 %v278, %v275
    %v384 = vpack.c.b16 %v279, %v276
    %v385 = vpack.c.b16 %v280, %v277
    %v386 = vpack.c.b16 %v284, %v281
    %v387 = vpack.c.b16 %v285, %v282
    %v388 = vpack.c.b16 %v286, %v283
    %v389 = vpack.c.b16 %v290, %v287
    %v390 = vpack.c.b16 %v291, %v288
    %v391 = vpack.c.b16 %v292, %v289
    %v392 = vpack.c.b16 %v296, %v293
    %v393 = vpack.c.b16 %v297, %v294
    %v394 = vpack.c.b16 %v298, %v295
    %v395 = vpack.c.b16 %v302, %v299
    %v396 = vpack.c.b16 %v303, %v300
    %v397 = vpack.c.b16 %v304, %v301
    %v398 = vpack.c.b16 %v308, %v305
    %v399 = vpack.c.b16 %v309, %v306
    %v400 = vpack.c.b16 %v310, %v307
    %v401 = vpack.c.b16 %v314, %v311
    %v402 = vpack.c.b16 %v315, %v312
    %v403 = vpack.c.b16 %v316, %v313
    %v404 = vpack.c.b16 %v320, %v317
    %v405 = vpack.c.b16 %v321, %v318
    %v406 = vpack.c.b16 %v322, %v319
    %v407 = vpack.c.b16 %v326, %v323
    %v408 = vpack.c.b16 %v327, %v324
    %v409 = vpack.c.b16 %v328, %v325
    %v410 = vpack.c.b16 %v332, %v329
    %v411 = vpack.c.b16 %v333, %v330
    %v412 = vpack.c.b16 %v334, %v331
    %v413 = vpack.c.b16 %v338, %v335
    %v414 = vpack.c.b16 %v339, %v336
    %v415 = vpack.c.b16 %v340, %v337
    %v416 = vpack.c.b16 %v344, %v341
    %v417 = vpack.c.b16 %v345, %v342
    %v418 = vpack.c.b16 %v346, %v343
    %v419 = vpack.c.b16 %v350, %v347
    %v420 = vpack.c.b16 %v351, %v348
    %v421 = vpack.c.b16 %v352, %v349
    %v422 = vpack.c.b16 %v356, %v353
    %v423 = vpack.c.b16 %v357, %v354
    %v424 = vpack.c.b16 %v358, %v355
    %vm491 = vcmask 785408
    %v493 = vsel %vm491, %v33, 0
    %495 = vmatprep.subr.bf16.mxu0 %v381
    %496 = vmatpush1.bf16.msra.mxu0 %v380
    %497 = vmatprep.subr.bf16.mxu0 %v378
    %498 = vmatpush1.bf16.msra.mxu0 %v377
    %499 = vmatprep.subr.bf16.mxu0 %v375
    %500 = vmatpush1.bf16.msra.mxu0 %v374
    %501 = vmatprep.subr.bf16.mxu0 %v372
    %502 = vmatpush1.bf16.msra.mxu0 %v371
    %503 = vmatprep.subr.bf16.mxu0 %v369
    %504 = vmatpush1.bf16.msra.mxu0 %v368
    %505 = vmatprep.subr.bf16.mxu0 %v366
    %506 = vmatpush1.bf16.msra.mxu0 %v365
    %507 = vmatprep.subr.bf16.mxu0 %v363
    %508 = vmatpush1.bf16.msra.mxu0 %v362
    %509 = vmatprep.subr.bf16.mxu0 %v360
    %510 = vmatpush1.bf16.msra.mxu0 %v359
    %511 = vmatprep.subr.bf16.mxu0 %v405
    %512 = vmatpush2.bf16.msra.mxu0 %v404
    %513 = vmatprep.subr.bf16.mxu0 %v402
    %514 = vmatpush2.bf16.msra.mxu0 %v401
    %515 = vmatprep.subr.bf16.mxu0 %v399
    %516 = vmatpush2.bf16.msra.mxu0 %v398
    %517 = vmatprep.subr.bf16.mxu0 %v396
    %518 = vmatpush2.bf16.msra.mxu0 %v395
    %519 = vmatprep.subr.bf16.mxu0 %v393
    %520 = vmatpush2.bf16.msra.mxu0 %v392
    %521 = vmatprep.subr.bf16.mxu0 %v390
    %522 = vmatpush2.bf16.msra.mxu0 %v389
    %523 = vmatprep.subr.bf16.mxu0 %v387
    %524 = vmatpush2.bf16.msra.mxu0 %v386
    %525 = vmatprep.subr.bf16.mxu0 %v384
    %526 = vmatpush2.bf16.msra.mxu0 %v383
    %527 = vmatprep.mubr.bf16.mxu0 %v32
    %528 = vmatmul.mubr.bf16.gmra.mxu0 %v31
    %v529 = vpop.f32.mrf.mxu0
    %v530 = vadd.f32 %v127, %v529
    %v531 = vpop.f32.mrf.mxu0
    %v532 = vadd.f32 %v131, %v531
    %v533 = vpop.f32.mrf.mxu0
    %v534 = vpop.f32.mrf.mxu0
    %535 = vdwg.mxu0
    %536 = vmatprep.subr.bf16.mxu0 0
    %537 = vmatpush1.bf16.msra.mxu0 0
    %538 = vmatprep.subr.bf16.mxu0 0
    %539 = vmatpush1.bf16.msra.mxu0 0
    %540 = vmatprep.subr.bf16.mxu0 %v423
    %541 = vmatpush1.bf16.msra.mxu0 %v422
    %542 = vmatprep.subr.bf16.mxu0 %v420
    %543 = vmatpush1.bf16.msra.mxu0 %v419
    %544 = vmatprep.subr.bf16.mxu0 %v417
    %545 = vmatpush1.bf16.msra.mxu0 %v416
    %546 = vmatprep.subr.bf16.mxu0 %v414
    %547 = vmatpush1.bf16.msra.mxu0 %v413
    %548 = vmatprep.subr.bf16.mxu0 %v411
    %549 = vmatpush1.bf16.msra.mxu0 %v410
    %550 = vmatprep.subr.bf16.mxu0 %v408
    %551 = vmatpush1.bf16.msra.mxu0 %v407
    %552 = vmatprep.subr.bf16.mxu0 0
    %553 = vmatpush2.bf16.msra.mxu0 0
    %554 = vmatprep.subr.bf16.mxu0 0
    %555 = vmatpush2.bf16.msra.mxu0 0
    %556 = vmatprep.subr.bf16.mxu0 0
    %557 = vmatpush2.bf16.msra.mxu0 0
    %558 = vmatprep.subr.bf16.mxu0 0
    %559 = vmatpush2.bf16.msra.mxu0 0
    %560 = vmatprep.subr.bf16.mxu0 0
    %561 = vmatpush2.bf16.msra.mxu0 0
    %562 = vmatprep.subr.bf16.mxu0 0
    %563 = vmatpush2.bf16.msra.mxu0 0
    %564 = vmatprep.subr.bf16.mxu0 0
    %565 = vmatpush2.bf16.msra.mxu0 0
    %566 = vmatprep.subr.bf16.mxu0 0
    %567 = vmatpush2.bf16.msra.mxu0 0
    %568 = vmatprep.mubr.bf16.mxu0 0
    %569 = vmatmul.mubr.bf16.gmra.mxu0 %v493
    %v570 = vpop.f32.mrf.mxu0
    %v571 = vadd.f32 %v530, %v570
    %v572 = vpop.f32.mrf.mxu0
    %v573 = vadd.f32 %v532, %v572
    %v574 = vpop.f32.mrf.mxu0
    %v575 = vpop.f32.mrf.mxu0
    %576 = vdwg.mxu0
    %577 = vmatprep.subr.bf16.mxu0 0
    %578 = vmatpush1.bf16.msra.mxu0 %v382
    %579 = vmatprep.subr.bf16.mxu0 0
    %580 = vmatpush1.bf16.msra.mxu0 %v379
    %581 = vmatprep.subr.bf16.mxu0 0
    %582 = vmatpush1.bf16.msra.mxu0 %v376
    %583 = vmatprep.subr.bf16.mxu0 0
    %584 = vmatpush1.bf16.msra.mxu0 %v373
    %585 = vmatprep.subr.bf16.mxu0 0
    %586 = vmatpush1.bf16.msra.mxu0 %v370
    %587 = vmatprep.subr.bf16.mxu0 0
    %588 = vmatpush1.bf16.msra.mxu0 %v367
    %589 = vmatprep.subr.bf16.mxu0 0
    %590 = vmatpush1.bf16.msra.mxu0 %v364
    %591 = vmatprep.subr.bf16.mxu0 0
    %592 = vmatpush1.bf16.msra.mxu0 %v361
    %593 = vmatprep.subr.bf16.mxu0 0
    %594 = vmatpush2.bf16.msra.mxu0 %v406
    %595 = vmatprep.subr.bf16.mxu0 0
    %596 = vmatpush2.bf16.msra.mxu0 %v403
    %597 = vmatprep.subr.bf16.mxu0 0
    %598 = vmatpush2.bf16.msra.mxu0 %v400
    %599 = vmatprep.subr.bf16.mxu0 0
    %600 = vmatpush2.bf16.msra.mxu0 %v397
    %601 = vmatprep.subr.bf16.mxu0 0
    %602 = vmatpush2.bf16.msra.mxu0 %v394
    %603 = vmatprep.subr.bf16.mxu0 0
    %604 = vmatpush2.bf16.msra.mxu0 %v391
    %605 = vmatprep.subr.bf16.mxu0 0
    %606 = vmatpush2.bf16.msra.mxu0 %v388
    %607 = vmatprep.subr.bf16.mxu0 0
    %608 = vmatpush2.bf16.msra.mxu0 %v385
    %609 = vmatprep.mubr.bf16.mxu0 %v32
    %610 = vmatmul.mubr.bf16.gmra.mxu0 %v31
    %v611 = vpop.f32.mrf.mxu0
    %v612 = vadd.f32 %v135, %v611
    %v613 = vpop.f32.mrf.mxu0
    %v614 = vpop.f32.mrf.mxu0
    %v615 = vpop.f32.mrf.mxu0
    %616 = vdwg.mxu0
    %617 = vmatprep.subr.bf16.mxu0 0
    %618 = vmatpush1.bf16.msra.mxu0 0
    %619 = vmatprep.subr.bf16.mxu0 0
    %620 = vmatpush1.bf16.msra.mxu0 0
    %621 = vmatprep.subr.bf16.mxu0 0
    %622 = vmatpush1.bf16.msra.mxu0 %v424
    %623 = vmatprep.subr.bf16.mxu0 0
    %624 = vmatpush1.bf16.msra.mxu0 %v421
    %625 = vmatprep.subr.bf16.mxu0 0
    %626 = vmatpush1.bf16.msra.mxu0 %v418
    %627 = vmatprep.subr.bf16.mxu0 0
    %628 = vmatpush1.bf16.msra.mxu0 %v415
    %629 = vmatprep.subr.bf16.mxu0 0
    %630 = vmatpush1.bf16.msra.mxu0 %v412
    %631 = vmatprep.subr.bf16.mxu0 0
    %632 = vmatpush1.bf16.msra.mxu0 %v409
    %633 = vmatprep.subr.bf16.mxu0 0
    %634 = vmatpush2.bf16.msra.mxu0 0
    %635 = vmatprep.subr.bf16.mxu0 0
    %636 = vmatpush2.bf16.msra.mxu0 0
    %637 = vmatprep.subr.bf16.mxu0 0
    %638 = vmatpush2.bf16.msra.mxu0 0
    %639 = vmatprep.subr.bf16.mxu0 0
    %640 = vmatpush2.bf16.msra.mxu0 0
    %641 = vmatprep.subr.bf16.mxu0 0
    %642 = vmatpush2.bf16.msra.mxu0 0
    %643 = vmatprep.subr.bf16.mxu0 0
    %644 = vmatpush2.bf16.msra.mxu0 0
    %645 = vmatprep.subr.bf16.mxu0 0
    %646 = vmatpush2.bf16.msra.mxu0 0
    %647 = vmatprep.subr.bf16.mxu0 0
    %648 = vmatpush2.bf16.msra.mxu0 0
    %649 = vmatprep.mubr.bf16.mxu0 0
    %650 = vmatmul.mubr.bf16.gmra.mxu0 %v493
    %v651 = vpop.f32.mrf.mxu0
    %v652 = vadd.f32 %v612, %v651
    %v653 = vpop.f32.mrf.mxu0
    %v654 = vpop.f32.mrf.mxu0
    %v655 = vpop.f32.mrf.mxu0
    %656 = vdwg.mxu0
    %v657 = vmax.f32 %v571, 0.0
    %v658 = vmax.f32 %v573, 0.0
    %v659 = vmax.f32 %v652, 0.0
    %v660 = vpack.c.bf16 %v657, %v657
    %v661 = vpack.c.bf16 %v658, %v658
    %v662 = vpack.c.bf16 %v659, %v659
    %v663 = vld [vmem:[%s3] sm:$0xff]
    %v664 = vld [vmem:[%s3 + $0x8] sm:$0xff]
    %v665 = vld [vmem:[%s3 + $0x10] sm:$0xff]
    %v666 = vld [vmem:[%s3 + $0x18] sm:$0xff]
    %v667 = vld [vmem:[%s3 + $0x20] sm:$0xff]
    %v668 = vld [vmem:[%s3 + $0x28] sm:$0xff]
    %v669 = vld [vmem:[%s3 + $0x30] sm:$0xff]
    %v670 = vld [vmem:[%s3 + $0x38] sm:$0xff]
    %v671 = vld [vmem:[%s3 + $0x40] sm:$0xff]
    %v672 = vld [vmem:[%s3 + $0x48] sm:$0xff]
    %v673 = vld [vmem:[%s3 + $0x50] sm:$0xff]
    %v674 = vld [vmem:[%s3 + $0x58] sm:$0xff]
    %v675 = vld [vmem:[%s3 + $0x60] sm:$0xff]
    %v676 = vld [vmem:[%s3 + $0x68] sm:$0xff]
    %v677 = vld [vmem:[%s3 + $0x70] sm:$0xff]
    %v678 = vld [vmem:[%s3 + $0x78] sm:$0xff]
    %v679 = vld [vmem:[%s3 + $0x80] sm:$0xff]
    %v680 = vld [vmem:[%s3 + $0x88] sm:$0xff]
    %v681 = vld [vmem:[%s3 + $0x90] sm:$0xff]
    %v682 = vld [vmem:[%s3 + $0x98] sm:$0xff]
    %v683 = vld [vmem:[%s3 + $0xa0] sm:$0xff]
    %v684 = vld [vmem:[%s3 + $0xa8] sm:$0xff]
    %v685 = vld [vmem:[%s3 + $0xb0] sm:$0xff]
    %v686 = vld [vmem:[%s3 + $0xb8] sm:$0xff]
    %v687 = vld [vmem:[%s3 + $0xc0] sm:$0xff]
    %v688 = vld [vmem:[%s3 + $0xc8] sm:$0xff]
    %v689 = vld [vmem:[%s3 + $0xd0] sm:$0xff]
    %v690 = vld [vmem:[%s3 + $0xd8] sm:$0xff]
    %v691 = vld [vmem:[%s3 + $0xe0] sm:$0xff]
    %v692 = vld [vmem:[%s3 + $0xe8] sm:$0xff]
    %v693 = vld [vmem:[%s3 + $0xf0] sm:$0xff]
    %v694 = vld [vmem:[%s3 + $0xf8] sm:$0xff]
    %v695 = vld [vmem:[%s3 + $0x100] sm:$0xff]
    %v696 = vld [vmem:[%s3 + $0x108] sm:$0xff]
    %v697 = vld [vmem:[%s3 + $0x110] sm:$0xff]
    %v698 = vld [vmem:[%s3 + $0x118] sm:$0xff]
    %v699 = vld [vmem:[%s3 + $0x120] sm:$0xff]
    %v700 = vld [vmem:[%s3 + $0x128] sm:$0xff]
    %v701 = vld [vmem:[%s3 + $0x130] sm:$0xff]
    %v702 = vld [vmem:[%s3 + $0x138] sm:$0xff]
    %v703 = vld [vmem:[%s3 + $0x140] sm:$0xff]
    %v704 = vld [vmem:[%s3 + $0x148] sm:$0xff]
    %v705 = vld [vmem:[%s3 + $0x150] sm:$0xff]
    %v706 = vld [vmem:[%s3 + $0x158] sm:$0xff]
    %v707 = vld [vmem:[%s3 + $0x160] sm:$0xff]
    %v708 = vld [vmem:[%s3 + $0x168] sm:$0xff]
    %v709 = vld [vmem:[%s3 + $0x170] sm:$0xff]
    %v710 = vld [vmem:[%s3 + $0x178] sm:$0xff]
    %v711 = vld [vmem:[%s4] sm:$0x3]
    %v713 = vlaneseq
    %v714 = vshrl.u32 %v713, 7
    %v715 = vsub.s32 0, %v714
    %v716 = vrot.slane %v711, %v715
    %v717 = vlaneseq
    %v718 = vshrl.u32 %v717, 7
    %v719 = vsub.s32 1, %v718
    %v720 = vrot.slane %v711, %v719
    %v771 = vunpack.c.l.b16 %v663
    %v772 = vunpack.c.h.b16 %v663
    %v773 = vunpack.c.l.b16 %v664
    %v774 = vunpack.c.h.b16 %v664
    %v775 = vunpack.c.l.b16 %v665
    %v776 = vunpack.c.h.b16 %v665
    %v777 = vunpack.c.l.b16 %v666
    %v778 = vunpack.c.h.b16 %v666
    %v779 = vunpack.c.l.b16 %v667
    %v780 = vunpack.c.h.b16 %v667
    %v781 = vunpack.c.l.b16 %v668
    %v782 = vunpack.c.h.b16 %v668
    %v783 = vunpack.c.l.b16 %v669
    %v784 = vunpack.c.h.b16 %v669
    %v785 = vunpack.c.l.b16 %v670
    %v786 = vunpack.c.h.b16 %v670
    %v787 = vunpack.c.l.b16 %v671
    %v788 = vunpack.c.h.b16 %v671
    %v789 = vunpack.c.l.b16 %v672
    %v790 = vunpack.c.h.b16 %v672
    %v791 = vunpack.c.l.b16 %v673
    %v792 = vunpack.c.h.b16 %v673
    %v793 = vunpack.c.l.b16 %v674
    %v794 = vunpack.c.h.b16 %v674
    %v795 = vunpack.c.l.b16 %v675
    %v796 = vunpack.c.h.b16 %v675
    %v797 = vunpack.c.l.b16 %v676
    %v798 = vunpack.c.h.b16 %v676
    %v799 = vunpack.c.l.b16 %v677
    %v800 = vunpack.c.h.b16 %v677
    %v801 = vunpack.c.l.b16 %v678
    %v802 = vunpack.c.h.b16 %v678
    %v803 = vunpack.c.l.b16 %v679
    %v804 = vunpack.c.h.b16 %v679
    %v805 = vunpack.c.l.b16 %v680
    %v806 = vunpack.c.h.b16 %v680
    %v807 = vunpack.c.l.b16 %v681
    %v808 = vunpack.c.h.b16 %v681
    %v809 = vunpack.c.l.b16 %v682
    %v810 = vunpack.c.h.b16 %v682
    %v811 = vunpack.c.l.b16 %v683
    %v812 = vunpack.c.h.b16 %v683
    %v813 = vunpack.c.l.b16 %v684
    %v814 = vunpack.c.h.b16 %v684
    %v815 = vunpack.c.l.b16 %v685
    %v816 = vunpack.c.h.b16 %v685
    %v817 = vunpack.c.l.b16 %v686
    %v818 = vunpack.c.h.b16 %v686
    %v819 = vunpack.c.l.b16 %v687
    %v820 = vunpack.c.h.b16 %v687
    %v821 = vunpack.c.l.b16 %v688
    %v822 = vunpack.c.h.b16 %v688
    %v823 = vunpack.c.l.b16 %v689
    %v824 = vunpack.c.h.b16 %v689
    %v825 = vunpack.c.l.b16 %v690
    %v826 = vunpack.c.h.b16 %v690
    %v827 = vunpack.c.l.b16 %v691
    %v828 = vunpack.c.h.b16 %v691
    %v829 = vunpack.c.l.b16 %v692
    %v830 = vunpack.c.h.b16 %v692
    %v831 = vunpack.c.l.b16 %v693
    %v832 = vunpack.c.h.b16 %v693
    %v833 = vunpack.c.l.b16 %v694
    %v834 = vunpack.c.h.b16 %v694
    %v835 = vunpack.c.l.b16 %v695
    %v836 = vunpack.c.h.b16 %v695
    %v837 = vunpack.c.l.b16 %v696
    %v838 = vunpack.c.h.b16 %v696
    %v839 = vunpack.c.l.b16 %v697
    %v840 = vunpack.c.h.b16 %v697
    %v841 = vunpack.c.l.b16 %v698
    %v842 = vunpack.c.h.b16 %v698
    %v843 = vunpack.c.l.b16 %v699
    %v844 = vunpack.c.h.b16 %v699
    %v845 = vunpack.c.l.b16 %v700
    %v846 = vunpack.c.h.b16 %v700
    %v847 = vunpack.c.l.b16 %v701
    %v848 = vunpack.c.h.b16 %v701
    %v849 = vunpack.c.l.b16 %v702
    %v850 = vunpack.c.h.b16 %v702
    %v851 = vunpack.c.l.b16 %v703
    %v852 = vunpack.c.h.b16 %v703
    %v853 = vunpack.c.l.b16 %v704
    %v854 = vunpack.c.h.b16 %v704
    %v855 = vunpack.c.l.b16 %v705
    %v856 = vunpack.c.h.b16 %v705
    %v857 = vunpack.c.l.b16 %v706
    %v858 = vunpack.c.h.b16 %v706
    %v859 = vunpack.c.l.b16 %v707
    %v860 = vunpack.c.h.b16 %v707
    %v861 = vunpack.c.l.b16 %v708
    %v862 = vunpack.c.h.b16 %v708
    %v863 = vunpack.c.l.b16 %v709
    %v864 = vunpack.c.h.b16 %v709
    %v865 = vunpack.c.l.b16 %v710
    %v866 = vunpack.c.h.b16 %v710
    %v867 = vpack.c.b16 %v773, %v771
    %v868 = vpack.c.b16 %v774, %v772
    %v869 = vpack.c.b16 %v777, %v775
    %v870 = vpack.c.b16 %v778, %v776
    %v871 = vpack.c.b16 %v781, %v779
    %v872 = vpack.c.b16 %v782, %v780
    %v873 = vpack.c.b16 %v785, %v783
    %v874 = vpack.c.b16 %v786, %v784
    %v875 = vpack.c.b16 %v789, %v787
    %v876 = vpack.c.b16 %v790, %v788
    %v877 = vpack.c.b16 %v793, %v791
    %v878 = vpack.c.b16 %v794, %v792
    %v879 = vpack.c.b16 %v797, %v795
    %v880 = vpack.c.b16 %v798, %v796
    %v881 = vpack.c.b16 %v801, %v799
    %v882 = vpack.c.b16 %v802, %v800
    %v883 = vpack.c.b16 %v805, %v803
    %v884 = vpack.c.b16 %v806, %v804
    %v885 = vpack.c.b16 %v809, %v807
    %v886 = vpack.c.b16 %v810, %v808
    %v887 = vpack.c.b16 %v813, %v811
    %v888 = vpack.c.b16 %v814, %v812
    %v889 = vpack.c.b16 %v817, %v815
    %v890 = vpack.c.b16 %v818, %v816
    %v891 = vpack.c.b16 %v821, %v819
    %v892 = vpack.c.b16 %v822, %v820
    %v893 = vpack.c.b16 %v825, %v823
    %v894 = vpack.c.b16 %v826, %v824
    %v895 = vpack.c.b16 %v829, %v827
    %v896 = vpack.c.b16 %v830, %v828
    %v897 = vpack.c.b16 %v833, %v831
    %v898 = vpack.c.b16 %v834, %v832
    %v899 = vpack.c.b16 %v837, %v835
    %v900 = vpack.c.b16 %v838, %v836
    %v901 = vpack.c.b16 %v841, %v839
    %v902 = vpack.c.b16 %v842, %v840
    %v903 = vpack.c.b16 %v845, %v843
    %v904 = vpack.c.b16 %v846, %v844
    %v905 = vpack.c.b16 %v849, %v847
    %v906 = vpack.c.b16 %v850, %v848
    %v907 = vpack.c.b16 %v853, %v851
    %v908 = vpack.c.b16 %v854, %v852
    %v909 = vpack.c.b16 %v857, %v855
    %v910 = vpack.c.b16 %v858, %v856
    %v911 = vpack.c.b16 %v861, %v859
    %v912 = vpack.c.b16 %v862, %v860
    %v913 = vpack.c.b16 %v865, %v863
    %v914 = vpack.c.b16 %v866, %v864
    %963 = vmatprep.subr.bf16.mxu0 %v882
    %964 = vmatpush1.bf16.msra.mxu0 %v881
    %965 = vmatprep.subr.bf16.mxu0 %v880
    %966 = vmatpush1.bf16.msra.mxu0 %v879
    %967 = vmatprep.subr.bf16.mxu0 %v878
    %968 = vmatpush1.bf16.msra.mxu0 %v877
    %969 = vmatprep.subr.bf16.mxu0 %v876
    %970 = vmatpush1.bf16.msra.mxu0 %v875
    %971 = vmatprep.subr.bf16.mxu0 %v874
    %972 = vmatpush1.bf16.msra.mxu0 %v873
    %973 = vmatprep.subr.bf16.mxu0 %v872
    %974 = vmatpush1.bf16.msra.mxu0 %v871
    %975 = vmatprep.subr.bf16.mxu0 %v870
    %976 = vmatpush1.bf16.msra.mxu0 %v869
    %977 = vmatprep.subr.bf16.mxu0 %v868
    %978 = vmatpush1.bf16.msra.mxu0 %v867
    %979 = vmatprep.subr.bf16.mxu0 %v898
    %980 = vmatpush2.bf16.msra.mxu0 %v897
    %981 = vmatprep.subr.bf16.mxu0 %v896
    %982 = vmatpush2.bf16.msra.mxu0 %v895
    %983 = vmatprep.subr.bf16.mxu0 %v894
    %984 = vmatpush2.bf16.msra.mxu0 %v893
    %985 = vmatprep.subr.bf16.mxu0 %v892
    %986 = vmatpush2.bf16.msra.mxu0 %v891
    %987 = vmatprep.subr.bf16.mxu0 %v890
    %988 = vmatpush2.bf16.msra.mxu0 %v889
    %989 = vmatprep.subr.bf16.mxu0 %v888
    %990 = vmatpush2.bf16.msra.mxu0 %v887
    %991 = vmatprep.subr.bf16.mxu0 %v886
    %992 = vmatpush2.bf16.msra.mxu0 %v885
    %993 = vmatprep.subr.bf16.mxu0 %v884
    %994 = vmatpush2.bf16.msra.mxu0 %v883
    %995 = vmatprep.mubr.bf16.mxu0 %v661
    %996 = vmatmul.mubr.bf16.gmra.mxu0 %v660
    %v997 = vpop.f32.mrf.mxu0
    %v998 = vadd.f32 %v716, %v997
    %v999 = vpop.f32.mrf.mxu0
    %v1000 = vadd.f32 %v720, %v999
    %v1001 = vpop.f32.mrf.mxu0
    %v1002 = vpop.f32.mrf.mxu0
    %1003 = vdwg.mxu0
    %1004 = vmatprep.subr.bf16.mxu0 %v914
    %1005 = vmatpush1.bf16.msra.mxu0 %v913
    %1006 = vmatprep.subr.bf16.mxu0 %v912
    %1007 = vmatpush1.bf16.msra.mxu0 %v911
    %1008 = vmatprep.subr.bf16.mxu0 %v910
    %1009 = vmatpush1.bf16.msra.mxu0 %v909
    %1010 = vmatprep.subr.bf16.mxu0 %v908
    %1011 = vmatpush1.bf16.msra.mxu0 %v907
    %1012 = vmatprep.subr.bf16.mxu0 %v906
    %1013 = vmatpush1.bf16.msra.mxu0 %v905
    %1014 = vmatprep.subr.bf16.mxu0 %v904
    %1015 = vmatpush1.bf16.msra.mxu0 %v903
    %1016 = vmatprep.subr.bf16.mxu0 %v902
    %1017 = vmatpush1.bf16.msra.mxu0 %v901
    %1018 = vmatprep.subr.bf16.mxu0 %v900
    %1019 = vmatpush1.bf16.msra.mxu0 %v899
    %1020 = vmatprep.subr.bf16.mxu0 0
    %1021 = vmatpush2.bf16.msra.mxu0 0
    %1022 = vmatprep.subr.bf16.mxu0 0
    %1023 = vmatpush2.bf16.msra.mxu0 0
    %1024 = vmatprep.subr.bf16.mxu0 0
    %1025 = vmatpush2.bf16.msra.mxu0 0
    %1026 = vmatprep.subr.bf16.mxu0 0
    %1027 = vmatpush2.bf16.msra.mxu0 0
    %1028 = vmatprep.subr.bf16.mxu0 0
    %1029 = vmatpush2.bf16.msra.mxu0 0
    %1030 = vmatprep.subr.bf16.mxu0 0
    %1031 = vmatpush2.bf16.msra.mxu0 0
    %1032 = vmatprep.subr.bf16.mxu0 0
    %1033 = vmatpush2.bf16.msra.mxu0 0
    %1034 = vmatprep.subr.bf16.mxu0 0
    %1035 = vmatpush2.bf16.msra.mxu0 0
    %1036 = vmatprep.mubr.bf16.mxu0 0
    %1037 = vmatmul.mubr.bf16.gmra.mxu0 %v662
    %v1038 = vpop.f32.mrf.mxu0
    %v1039 = vadd.f32 %v998, %v1038
    %v1040 = vpop.f32.mrf.mxu0
    %v1041 = vadd.f32 %v1000, %v1040
    %v1042 = vpop.f32.mrf.mxu0
    %v1043 = vpop.f32.mrf.mxu0
    %1044 = vdwg.mxu0
    %v1045 = vmax.f32 %v1039, 0.0
    %v1046 = vmax.f32 %v1041, 0.0
    %v1047 = vpack.c.bf16 %v1045, %v1045
    %v1048 = vpack.c.bf16 %v1046, %v1046
    %v1049 = vld [vmem:[%s5] sm:$0xf]
    %v1050 = vld [vmem:[%s5 + $0x4] sm:$0xf]
    %v1051 = vld [vmem:[%s5 + $0x8] sm:$0xf]
    %v1052 = vld [vmem:[%s5 + $0xc] sm:$0xf]
    %v1053 = vld [vmem:[%s5 + $0x10] sm:$0xf]
    %v1054 = vld [vmem:[%s5 + $0x14] sm:$0xf]
    %v1055 = vld [vmem:[%s5 + $0x18] sm:$0xf]
    %v1056 = vld [vmem:[%s5 + $0x1c] sm:$0xf]
    %v1057 = vld [vmem:[%s5 + $0x20] sm:$0xf]
    %v1058 = vld [vmem:[%s5 + $0x24] sm:$0xf]
    %v1059 = vld [vmem:[%s5 + $0x28] sm:$0xf]
    %v1060 = vld [vmem:[%s5 + $0x2c] sm:$0xf]
    %v1061 = vld [vmem:[%s5 + $0x30] sm:$0xf]
    %v1062 = vld [vmem:[%s5 + $0x34] sm:$0xf]
    %v1063 = vld [vmem:[%s5 + $0x38] sm:$0xf]
    %v1064 = vld [vmem:[%s5 + $0x3c] sm:$0xf]
    %v1065 = vld [vmem:[%s5 + $0x40] sm:$0xf]
    %v1066 = vld [vmem:[%s5 + $0x44] sm:$0xf]
    %v1067 = vld [vmem:[%s5 + $0x48] sm:$0xf]
    %v1068 = vld [vmem:[%s5 + $0x4c] sm:$0xf]
    %v1069 = vld [vmem:[%s5 + $0x50] sm:$0xf]
    %v1070 = vld [vmem:[%s5 + $0x54] sm:$0xf]
    %v1071 = vld [vmem:[%s5 + $0x58] sm:$0xf]
    %v1072 = vld [vmem:[%s5 + $0x5c] sm:$0xf]
    %v1073 = vld [vmem:[%s6] sm:$0x1]
    %v1075 = vlaneseq
    %v1076 = vshrl.u32 %v1075, 7
    %v1077 = vsub.s32 0, %v1076
    %v1078 = vrot.slane %v1073, %v1077
    %v1104 = vunpack.c.l.b16 %v1049
    %v1105 = vunpack.c.l.b16 %v1050
    %v1106 = vunpack.c.l.b16 %v1051
    %v1107 = vunpack.c.l.b16 %v1052
    %v1108 = vunpack.c.l.b16 %v1053
    %v1109 = vunpack.c.l.b16 %v1054
    %v1110 = vunpack.c.l.b16 %v1055
    %v1111 = vunpack.c.l.b16 %v1056
    %v1112 = vunpack.c.l.b16 %v1057
    %v1113 = vunpack.c.l.b16 %v1058
    %v1114 = vunpack.c.l.b16 %v1059
    %v1115 = vunpack.c.l.b16 %v1060
    %v1116 = vunpack.c.l.b16 %v1061
    %v1117 = vunpack.c.l.b16 %v1062
    %v1118 = vunpack.c.l.b16 %v1063
    %v1119 = vunpack.c.l.b16 %v1064
    %v1120 = vunpack.c.l.b16 %v1065
    %v1121 = vunpack.c.l.b16 %v1066
    %v1122 = vunpack.c.l.b16 %v1067
    %v1123 = vunpack.c.l.b16 %v1068
    %v1124 = vunpack.c.l.b16 %v1069
    %v1125 = vunpack.c.l.b16 %v1070
    %v1126 = vunpack.c.l.b16 %v1071
    %v1127 = vunpack.c.l.b16 %v1072
    %v1128 = vpack.c.b16 %v1105, %v1104
    %v1129 = vpack.c.b16 %v1107, %v1106
    %v1130 = vpack.c.b16 %v1109, %v1108
    %v1131 = vpack.c.b16 %v1111, %v1110
    %v1132 = vpack.c.b16 %v1113, %v1112
    %v1133 = vpack.c.b16 %v1115, %v1114
    %v1134 = vpack.c.b16 %v1117, %v1116
    %v1135 = vpack.c.b16 %v1119, %v1118
    %v1136 = vpack.c.b16 %v1121, %v1120
    %v1137 = vpack.c.b16 %v1123, %v1122
    %v1138 = vpack.c.b16 %v1125, %v1124
    %v1139 = vpack.c.b16 %v1127, %v1126
    %vm1152 = vcmask 523264
    %v1154 = vsel %vm1152, %v1048, 0
    %1156 = vmatprep.subr.bf16.mxu0 0
    %1157 = vmatpush1.bf16.msra.mxu0 %v1135
    %1158 = vmatprep.subr.bf16.mxu0 0
    %1159 = vmatpush1.bf16.msra.mxu0 %v1134
    %1160 = vmatprep.subr.bf16.mxu0 0
    %1161 = vmatpush1.bf16.msra.mxu0 %v1133
    %1162 = vmatprep.subr.bf16.mxu0 0
    %1163 = vmatpush1.bf16.msra.mxu0 %v1132
    %1164 = vmatprep.subr.bf16.mxu0 0
    %1165 = vmatpush1.bf16.msra.mxu0 %v1131
    %1166 = vmatprep.subr.bf16.mxu0 0
    %1167 = vmatpush1.bf16.msra.mxu0 %v1130
    %1168 = vmatprep.subr.bf16.mxu0 0
    %1169 = vmatpush1.bf16.msra.mxu0 %v1129
    %1170 = vmatprep.subr.bf16.mxu0 0
    %1171 = vmatpush1.bf16.msra.mxu0 %v1128
    %1172 = vmatprep.subr.bf16.mxu0 0
    %1173 = vmatpush2.bf16.msra.mxu0 0
    %1174 = vmatprep.subr.bf16.mxu0 0
    %1175 = vmatpush2.bf16.msra.mxu0 0
    %1176 = vmatprep.subr.bf16.mxu0 0
    %1177 = vmatpush2.bf16.msra.mxu0 0
    %1178 = vmatprep.subr.bf16.mxu0 0
    %1179 = vmatpush2.bf16.msra.mxu0 0
    %1180 = vmatprep.subr.bf16.mxu0 0
    %1181 = vmatpush2.bf16.msra.mxu0 %v1139
    %1182 = vmatprep.subr.bf16.mxu0 0
    %1183 = vmatpush2.bf16.msra.mxu0 %v1138
    %1184 = vmatprep.subr.bf16.mxu0 0
    %1185 = vmatpush2.bf16.msra.mxu0 %v1137
    %1186 = vmatprep.subr.bf16.mxu0 0
    %1187 = vmatpush2.bf16.msra.mxu0 %v1136
    %1188 = vmatprep.mubr.bf16.mxu0 %v1154
    %1189 = vmatmul.mubr.bf16.gmra.mxu0 %v1047
    %v1190 = vpop.f32.mrf.mxu0
    %v1191 = vadd.f32 %v1078, %v1190
    %v1192 = vpop.f32.mrf.mxu0
    %v1193 = vpop.f32.mrf.mxu0
    %v1194 = vpop.f32.mrf.mxu0
    %1195 = vdwg.mxu0
    %v1196 = vpack.c.bf16 %v1191, %v1191
    %1197 = vst [vmem:[#allocation2] sm:$0xf] %v1196
    // Predicated region
    $region30: #{tpu_custom_call.1} parent=1 // pred_check
      _
    $region31: #{tpu_custom_call.1} parent=1 // pred_check_branch
      %1199 = sbr.rel (0) target = $region33
    $region32: #{tpu_custom_call.1} parent=1 // pred_region
      %s1201 = ssub.s32 64, 64
      %1202 = vsyncadd [#allocation3], %s1201
      %s1204 = sshll.u32 [#allocation2], 4
      %s1205 = int_to_ptr.vmem [resolvable:$true] %s1204
      %1207 = dma.vmem_to_hbm [thread:$0]  %s1205, 64, %s7, [#allocation3]
    $region33: #{tpu_custom_call.1} parent=1 // pred_fallthru
      _
    // Predicated region
    $region34: #{tpu_custom_call.1} parent=1 // pred_check
      _
    $region35: #{tpu_custom_call.1} parent=1 // pred_check_branch
      %1209 = sbr.rel (0) target = $region37
    $region36: #{tpu_custom_call.1} parent=1 // pred_region
      %1210 = dma.done [#allocation3], 64
    $region37: #{tpu_custom_call.1} parent=1 // pred_fallthru
      _
    %1211 = vsyncpa [#allocation3], 1

// kernel: tpu_custom_call.1
$region0: #{tpu_custom_call.1}
  #allocation0 [shape = 'u32[]', space=smem, size = 0x4, offset = 0x4, fixed_abs, tag = 'smem constant byte address 0x4 - core index']
  #allocation1 [shape = 'u32[144,128]{1,0:T(1,128)}', space=vmem, size = 0x12000, scoped, tag = 'internal scratch']
  %s0 = inlined_call_operand.vmem [shape: f32[8,352], index: 0, kind: input, shape index: {}]
  %s1 = inlined_call_operand.vmem [shape: bf16[352,384], index: 1, kind: input, shape index: {}]
  %s2 = inlined_call_operand.vmem [shape: f32[1,384], index: 2, kind: input, shape index: {}]
  %s3 = inlined_call_operand.vmem [shape: bf16[384,192], index: 3, kind: input, shape index: {}]
  %s4 = inlined_call_operand.vmem [shape: f32[1,192], index: 4, kind: input, shape index: {}]
  %s5 = inlined_call_operand.vmem [shape: bf16[192,128], index: 5, kind: input, shape index: {}]
  %s6 = inlined_call_operand.vmem [shape: f32[1,128], index: 6, kind: input, shape index: {}]
  %s7 = inlined_call_operand.hbm [shape: bf16[8,128], index: 7, kind: output, shape index: {}]
  %s8 = sld [smem:[#allocation0]]
  $region38: #{tpu_custom_call.1} parent=0
    _
  %s10 = ssub.s32 1, %s8
  %s11 = scalar_select 0, %s10, %s8
  $region1: #{tpu_custom_call.1} parent=0
    #allocation2 [shape = 'u8[2048]{0}', space=vmem, size = 0x800, scoped, tag = 'output window, operand 0, single buffered']
    #allocation3 [shape = 's32[1]{0}', space=sflag, size = 0x4, scoped, tag = 'scoped memory for tpu_custom_call.1']
    %12 = vsyncpa [#allocation3], 0
    // Predicated region
    $region2: #{tpu_custom_call.1} parent=1 // pred_check
      _
    $region3: #{tpu_custom_call.1} parent=1 // pred_check_branch
      %14 = sbr.rel (0) target = $region5
    $region4: #{tpu_custom_call.1} parent=1 // pred_region
      _
    $region5: #{tpu_custom_call.1} parent=1 // pred_fallthru
      _
    // Predicated region
    $region6: #{tpu_custom_call.1} parent=1 // pred_check
      _
    $region7: #{tpu_custom_call.1} parent=1 // pred_check_branch
      %16 = sbr.rel (0) target = $region9
    $region8: #{tpu_custom_call.1} parent=1 // pred_region
      _
    $region9: #{tpu_custom_call.1} parent=1 // pred_fallthru
      _
    // Predicated region
    $region10: #{tpu_custom_call.1} parent=1 // pred_check
      _
    $region11: #{tpu_custom_call.1} parent=1 // pred_check_branch
      %18 = sbr.rel (0) target = $region13
    $region12: #{tpu_custom_call.1} parent=1 // pred_region
      _
    $region13: #{tpu_custom_call.1} parent=1 // pred_fallthru
      _
    // Predicated region
    $region14: #{tpu_custom_call.1} parent=1 // pred_check
      _
    $region15: #{tpu_custom_call.1} parent=1 // pred_check_branch
      %20 = sbr.rel (0) target = $region17
    $region16: #{tpu_custom_call.1} parent=1 // pred_region
      _
    $region17: #{tpu_custom_call.1} parent=1 // pred_fallthru
      _
    // Predicated region
    $region18: #{tpu_custom_call.1} parent=1 // pred_check
      _
    $region19: #{tpu_custom_call.1} parent=1 // pred_check_branch
      %22 = sbr.rel (0) target = $region21
    $region20: #{tpu_custom_call.1} parent=1 // pred_region
      _
    $region21: #{tpu_custom_call.1} parent=1 // pred_fallthru
      _
    // Predicated region
    $region22: #{tpu_custom_call.1} parent=1 // pred_check
      _
    $region23: #{tpu_custom_call.1} parent=1 // pred_check_branch
      %24 = sbr.rel (0) target = $region25
    $region24: #{tpu_custom_call.1} parent=1 // pred_region
      _
    $region25: #{tpu_custom_call.1} parent=1 // pred_fallthru
      _
    // Predicated region
    $region26: #{tpu_custom_call.1} parent=1 // pred_check
      _
    $region27: #{tpu_custom_call.1} parent=1 // pred_check_branch
      %26 = sbr.rel (0) target = $region29
    $region28: #{tpu_custom_call.1} parent=1 // pred_region
      _
    $region29: #{tpu_custom_call.1} parent=1 // pred_fallthru
      _
    %v28 = vld [vmem:[%s0] sm:$0xff]
    %v29 = vld [vmem:[%s0 + $0x8] sm:$0xff]
    %v30 = vld [vmem:[%s0 + $0x10] sm:$0xff]
    %v31 = vpack.c.bf16 %v28, %v28
    %v32 = vpack.c.bf16 %v29, %v29
    %v33 = vpack.c.bf16 %v30, %v30
    %v34 = vld [vmem:[%s1] sm:$0xff]
    %v35 = vld [vmem:[%s1 + $0x8] sm:$0xf]
    %v36 = vld [vmem:[%s1 + $0xc] sm:$0xff]
    %v37 = vld [vmem:[%s1 + $0x14] sm:$0xf]
    %v38 = vld [vmem:[%s1 + $0x18] sm:$0xff]
    %v39 = vld [vmem:[%s1 + $0x20] sm:$0xf]
    %v40 = vld [vmem:[%s1 + $0x24] sm:$0xff]
    %v41 = vld [vmem:[%s1 + $0x2c] sm:$0xf]
    %v42 = vld [vmem:[%s1 + $0x30] sm:$0xff]
    %v43 = vld [vmem:[%s1 + $0x38] sm:$0xf]
    %v44 = vld [vmem:[%s1 + $0x3c] sm:$0xff]
    %v45 = vld [vmem:[%s1 + $0x44] sm:$0xf]
    %v46 = vld [vmem:[%s1 + $0x48] sm:$0xff]
    %v47 = vld [vmem:[%s1 + $0x50] sm:$0xf]
    %v48 = vld [vmem:[%s1 + $0x54] sm:$0xff]
    %v49 = vld [vmem:[%s1 + $0x5c] sm:$0xf]
    %v50 = vld [vmem:[%s1 + $0x60] sm:$0xff]
    %v51 = vld [vmem:[%s1 + $0x68] sm:$0xf]
    %v52 = vld [vmem:[%s1 + $0x6c] sm:$0xff]
    %v53 = vld [vmem:[%s1 + $0x74] sm:$0xf]
    %v54 = vld [vmem:[%s1 + $0x78] sm:$0xff]
    %v55 = vld [vmem:[%s1 + $0x80] sm:$0xf]
    %v56 = vld [vmem:[%s1 + $0x84] sm:$0xff]
    %v57 = vld [vmem:[%s1 + $0x8c] sm:$0xf]
    %v58 = vld [vmem:[%s1 + $0x90] sm:$0xff]
    %v59 = vld [vmem:[%s1 + $0x98] sm:$0xf]
    %v60 = vld [vmem:[%s1 + $0x9c] sm:$0xff]
    %v61 = vld [vmem:[%s1 + $0xa4] sm:$0xf]
    %v62 = vld [vmem:[%s1 + $0xa8] sm:$0xff]
    %v63 = vld [vmem:[%s1 + $0xb0] sm:$0xf]
    %v64 = vld [vmem:[%s1 + $0xb4] sm:$0xff]
    %v65 = vld [vmem:[%s1 + $0xbc] sm:$0xf]
    %v66 = vld [vmem:[%s1 + $0xc0] sm:$0xff]
    %v67 = vld [vmem:[%s1 + $0xc8] sm:$0xf]
    %v68 = vld [vmem:[%s1 + $0xcc] sm:$0xff]
    %v69 = vld [vmem:[%s1 + $0xd4] sm:$0xf]
    %v70 = vld [vmem:[%s1 + $0xd8] sm:$0xff]
    %v71 = vld [vmem:[%s1 + $0xe0] sm:$0xf]
    %v72 = vld [vmem:[%s1 + $0xe4] sm:$0xff]
    %v73 = vld [vmem:[%s1 + $0xec] sm:$0xf]
    %v74 = vld [vmem:[%s1 + $0xf0] sm:$0xff]
    %v75 = vld [vmem:[%s1 + $0xf8] sm:$0xf]
    %v76 = vld [vmem:[%s1 + $0xfc] sm:$0xff]
    %v77 = vld [vmem:[%s1 + $0x104] sm:$0xf]
    %v78 = vld [vmem:[%s1 + $0x108] sm:$0xff]
    %v79 = vld [vmem:[%s1 + $0x110] sm:$0xf]
    %v80 = vld [vmem:[%s1 + $0x114] sm:$0xff]
    %v81 = vld [vmem:[%s1 + $0x11c] sm:$0xf]
    %v82 = vld [vmem:[%s1 + $0x120] sm:$0xff]
    %v83 = vld [vmem:[%s1 + $0x128] sm:$0xf]
    %v84 = vld [vmem:[%s1 + $0x12c] sm:$0xff]
    %v85 = vld [vmem:[%s1 + $0x134] sm:$0xf]
    %v86 = vld [vmem:[%s1 + $0x138] sm:$0xff]
    %v87 = vld [vmem:[%s1 + $0x140] sm:$0xf]
    %v88 = vld [vmem:[%s1 + $0x144] sm:$0xff]
    %v89 = vld [vmem:[%s1 + $0x14c] sm:$0xf]
    %v90 = vld [vmem:[%s1 + $0x150] sm:$0xff]
    %v91 = vld [vmem:[%s1 + $0x158] sm:$0xf]
    %v92 = vld [vmem:[%s1 + $0x15c] sm:$0xff]
    %v93 = vld [vmem:[%s1 + $0x164] sm:$0xf]
    %v94 = vld [vmem:[%s1 + $0x168] sm:$0xff]
    %v95 = vld [vmem:[%s1 + $0x170] sm:$0xf]
    %v96 = vld [vmem:[%s1 + $0x174] sm:$0xff]
    %v97 = vld [vmem:[%s1 + $0x17c] sm:$0xf]
    %v98 = vld [vmem:[%s1 + $0x180] sm:$0xff]
    %v99 = vld [vmem:[%s1 + $0x188] sm:$0xf]
    %v100 = vld [vmem:[%s1 + $0x18c] sm:$0xff]
    %v101 = vld [vmem:[%s1 + $0x194] sm:$0xf]
    %v102 = vld [vmem:[%s1 + $0x198] sm:$0xff]
    %v103 = vld [vmem:[%s1 + $0x1a0] sm:$0xf]
    %v104 = vld [vmem:[%s1 + $0x1a4] sm:$0xff]
    %v105 = vld [vmem:[%s1 + $0x1ac] sm:$0xf]
    %v106 = vld [vmem:[%s1 + $0x1b0] sm:$0xff]
    %v107 = vld [vmem:[%s1 + $0x1b8] sm:$0xf]
    %v108 = vld [vmem:[%s1 + $0x1bc] sm:$0xff]
    %v109 = vld [vmem:[%s1 + $0x1c4] sm:$0xf]
    %v110 = vld [vmem:[%s1 + $0x1c8] sm:$0xff]
    %v111 = vld [vmem:[%s1 + $0x1d0] sm:$0xf]
    %v112 = vld [vmem:[%s1 + $0x1d4] sm:$0xff]
    %v113 = vld [vmem:[%s1 + $0x1dc] sm:$0xf]
    %v114 = vld [vmem:[%s1 + $0x1e0] sm:$0xff]
    %v115 = vld [vmem:[%s1 + $0x1e8] sm:$0xf]
    %v116 = vld [vmem:[%s1 + $0x1ec] sm:$0xff]
    %v117 = vld [vmem:[%s1 + $0x1f4] sm:$0xf]
    %v118 = vld [vmem:[%s1 + $0x1f8] sm:$0xff]
    %v119 = vld [vmem:[%s1 + $0x200] sm:$0xf]
    %v120 = vld [vmem:[%s1 + $0x204] sm:$0xff]
    %v121 = vld [vmem:[%s1 + $0x20c] sm:$0xf]
    %v122 = vld [vmem:[%s2] sm:$0x7]
    %v124 = vlaneseq
    %v125 = vshrl.u32 %v124, 7
    %v126 = vsub.s32 0, %v125
    %v127 = vrot.slane %v122, %v126
    %v128 = vlaneseq
    %v129 = vshrl.u32 %v128, 7
    %v130 = vsub.s32 1, %v129
    %v131 = vrot.slane %v122, %v130
    %v132 = vlaneseq
    %v133 = vshrl.u32 %v132, 7
    %v134 = vsub.s32 2, %v133
    %v135 = vrot.slane %v122, %v134
    %v227 = vunpack.c.l.b16 %v34
    %v228 = vunpack.c.h.b16 %v34
    %v229 = vunpack.c.l.b16 %v35
    %v230 = vunpack.c.l.b16 %v36
    %v231 = vunpack.c.h.b16 %v36
    %v232 = vunpack.c.l.b16 %v37
    %v233 = vunpack.c.l.b16 %v38
    %v234 = vunpack.c.h.b16 %v38
    %v235 = vunpack.c.l.b16 %v39
    %v236 = vunpack.c.l.b16 %v40
    %v237 = vunpack.c.h.b16 %v40
    %v238 = vunpack.c.l.b16 %v41
    %v239 = vunpack.c.l.b16 %v42
    %v240 = vunpack.c.h.b16 %v42
    %v241 = vunpack.c.l.b16 %v43
    %v242 = vunpack.c.l.b16 %v44
    %v243 = vunpack.c.h.b16 %v44
    %v244 = vunpack.c.l.b16 %v45
    %v245 = vunpack.c.l.b16 %v46
    %v246 = vunpack.c.h.b16 %v46
    %v247 = vunpack.c.l.b16 %v47
    %v248 = vunpack.c.l.b16 %v48
    %v249 = vunpack.c.h.b16 %v48
    %v250 = vunpack.c.l.b16 %v49
    %v251 = vunpack.c.l.b16 %v50
    %v252 = vunpack.c.h.b16 %v50
    %v253 = vunpack.c.l.b16 %v51
    %v254 = vunpack.c.l.b16 %v52
    %v255 = vunpack.c.h.b16 %v52
    %v256 = vunpack.c.l.b16 %v53
    %v257 = vunpack.c.l.b16 %v54
    %v258 = vunpack.c.h.b16 %v54
    %v259 = vunpack.c.l.b16 %v55
    %v260 = vunpack.c.l.b16 %v56
    %v261 = vunpack.c.h.b16 %v56
    %v262 = vunpack.c.l.b16 %v57
    %v263 = vunpack.c.l.b16 %v58
    %v264 = vunpack.c.h.b16 %v58
    %v265 = vunpack.c.l.b16 %v59
    %v266 = vunpack.c.l.b16 %v60
    %v267 = vunpack.c.h.b16 %v60
    %v268 = vunpack.c.l.b16 %v61
    %v269 = vunpack.c.l.b16 %v62
    %v270 = vunpack.c.h.b16 %v62
    %v271 = vunpack.c.l.b16 %v63
    %v272 = vunpack.c.l.b16 %v64
    %v273 = vunpack.c.h.b16 %v64
    %v274 = vunpack.c.l.b16 %v65
    %v275 = vunpack.c.l.b16 %v66
    %v276 = vunpack.c.h.b16 %v66
    %v277 = vunpack.c.l.b16 %v67
    %v278 = vunpack.c.l.b16 %v68
    %v279 = vunpack.c.h.b16 %v68
    %v280 = vunpack.c.l.b16 %v69
    %v281 = vunpack.c.l.b16 %v70
    %v282 = vunpack.c.h.b16 %v70
    %v283 = vunpack.c.l.b16 %v71
    %v284 = vunpack.c.l.b16 %v72
    %v285 = vunpack.c.h.b16 %v72
    %v286 = vunpack.c.l.b16 %v73
    %v287 = vunpack.c.l.b16 %v74
    %v288 = vunpack.c.h.b16 %v74
    %v289 = vunpack.c.l.b16 %v75
    %v290 = vunpack.c.l.b16 %v76
    %v291 = vunpack.c.h.b16 %v76
    %v292 = vunpack.c.l.b16 %v77
    %v293 = vunpack.c.l.b16 %v78
    %v294 = vunpack.c.h.b16 %v78
    %v295 = vunpack.c.l.b16 %v79
    %v296 = vunpack.c.l.b16 %v80
    %v297 = vunpack.c.h.b16 %v80
    %v298 = vunpack.c.l.b16 %v81
    %v299 = vunpack.c.l.b16 %v82
    %v300 = vunpack.c.h.b16 %v82
    %v301 = vunpack.c.l.b16 %v83
    %v302 = vunpack.c.l.b16 %v84
    %v303 = vunpack.c.h.b16 %v84
    %v304 = vunpack.c.l.b16 %v85
    %v305 = vunpack.c.l.b16 %v86
    %v306 = vunpack.c.h.b16 %v86
    %v307 = vunpack.c.l.b16 %v87
    %v308 = vunpack.c.l.b16 %v88
    %v309 = vunpack.c.h.b16 %v88
    %v310 = vunpack.c.l.b16 %v89
    %v311 = vunpack.c.l.b16 %v90
    %v312 = vunpack.c.h.b16 %v90
    %v313 = vunpack.c.l.b16 %v91
    %v314 = vunpack.c.l.b16 %v92
    %v315 = vunpack.c.h.b16 %v92
    %v316 = vunpack.c.l.b16 %v93
    %v317 = vunpack.c.l.b16 %v94
    %v318 = vunpack.c.h.b16 %v94
    %v319 = vunpack.c.l.b16 %v95
    %v320 = vunpack.c.l.b16 %v96
    %v321 = vunpack.c.h.b16 %v96
    %v322 = vunpack.c.l.b16 %v97
    %v323 = vunpack.c.l.b16 %v98
    %v324 = vunpack.c.h.b16 %v98
    %v325 = vunpack.c.l.b16 %v99
    %v326 = vunpack.c.l.b16 %v100
    %v327 = vunpack.c.h.b16 %v100
    %v328 = vunpack.c.l.b16 %v101
    %v329 = vunpack.c.l.b16 %v102
    %v330 = vunpack.c.h.b16 %v102
    %v331 = vunpack.c.l.b16 %v103
    %v332 = vunpack.c.l.b16 %v104
    %v333 = vunpack.c.h.b16 %v104
    %v334 = vunpack.c.l.b16 %v105
    %v335 = vunpack.c.l.b16 %v106
    %v336 = vunpack.c.h.b16 %v106
    %v337 = vunpack.c.l.b16 %v107
    %v338 = vunpack.c.l.b16 %v108
    %v339 = vunpack.c.h.b16 %v108
    %v340 = vunpack.c.l.b16 %v109
    %v341 = vunpack.c.l.b16 %v110
    %v342 = vunpack.c.h.b16 %v110
    %v343 = vunpack.c.l.b16 %v111
    %v344 = vunpack.c.l.b16 %v112
    %v345 = vunpack.c.h.b16 %v112
    %v346 = vunpack.c.l.b16 %v113
    %v347 = vunpack.c.l.b16 %v114
    %v348 = vunpack.c.h.b16 %v114
    %v349 = vunpack.c.l.b16 %v115
    %v350 = vunpack.c.l.b16 %v116
    %v351 = vunpack.c.h.b16 %v116
    %v352 = vunpack.c.l.b16 %v117
    %v353 = vunpack.c.l.b16 %v118
    %v354 = vunpack.c.h.b16 %v118
    %v355 = vunpack.c.l.b16 %v119
    %v356 = vunpack.c.l.b16 %v120
    %v357 = vunpack.c.h.b16 %v120
    %v358 = vunpack.c.l.b16 %v121
    %v359 = vpack.c.b16 %v230, %v227
    %v360 = vpack.c.b16 %v231, %v228
    %v361 = vpack.c.b16 %v232, %v229
    %v362 = vpack.c.b16 %v236, %v233
    %v363 = vpack.c.b16 %v237, %v234
    %v364 = vpack.c.b16 %v238, %v235
    %v365 = vpack.c.b16 %v242, %v239
    %v366 = vpack.c.b16 %v243, %v240
    %v367 = vpack.c.b16 %v244, %v241
    %v368 = vpack.c.b16 %v248, %v245
    %v369 = vpack.c.b16 %v249, %v246
    %v370 = vpack.c.b16 %v250, %v247
    %v371 = vpack.c.b16 %v254, %v251
    %v372 = vpack.c.b16 %v255, %v252
    %v373 = vpack.c.b16 %v256, %v253
    %v374 = vpack.c.b16 %v260, %v257
    %v375 = vpack.c.b16 %v261, %v258
    %v376 = vpack.c.b16 %v262, %v259
    %v377 = vpack.c.b16 %v266, %v263
    %v378 = vpack.c.b16 %v267, %v264
    %v379 = vpack.c.b16 %v268, %v265
    %v380 = vpack.c.b16 %v272, %v269
    %v381 = vpack.c.b16 %v273, %v270
    %v382 = vpack.c.b16 %v274, %v271
    %v383 = vpack.c.b16 %v278, %v275
    %v384 = vpack.c.b16 %v279, %v276
    %v385 = vpack.c.b16 %v280, %v277
    %v386 = vpack.c.b16 %v284, %v281
    %v387 = vpack.c.b16 %v285, %v282
    %v388 = vpack.c.b16 %v286, %v283
    %v389 = vpack.c.b16 %v290, %v287
    %v390 = vpack.c.b16 %v291, %v288
    %v391 = vpack.c.b16 %v292, %v289
    %v392 = vpack.c.b16 %v296, %v293
    %v393 = vpack.c.b16 %v297, %v294
    %v394 = vpack.c.b16 %v298, %v295
    %v395 = vpack.c.b16 %v302, %v299
    %v396 = vpack.c.b16 %v303, %v300
    %v397 = vpack.c.b16 %v304, %v301
    %v398 = vpack.c.b16 %v308, %v305
    %v399 = vpack.c.b16 %v309, %v306
    %v400 = vpack.c.b16 %v310, %v307
    %v401 = vpack.c.b16 %v314, %v311
    %v402 = vpack.c.b16 %v315, %v312
    %v403 = vpack.c.b16 %v316, %v313
    %v404 = vpack.c.b16 %v320, %v317
    %v405 = vpack.c.b16 %v321, %v318
    %v406 = vpack.c.b16 %v322, %v319
    %v407 = vpack.c.b16 %v326, %v323
    %v408 = vpack.c.b16 %v327, %v324
    %v409 = vpack.c.b16 %v328, %v325
    %v410 = vpack.c.b16 %v332, %v329
    %v411 = vpack.c.b16 %v333, %v330
    %v412 = vpack.c.b16 %v334, %v331
    %v413 = vpack.c.b16 %v338, %v335
    %v414 = vpack.c.b16 %v339, %v336
    %v415 = vpack.c.b16 %v340, %v337
    %v416 = vpack.c.b16 %v344, %v341
    %v417 = vpack.c.b16 %v345, %v342
    %v418 = vpack.c.b16 %v346, %v343
    %v419 = vpack.c.b16 %v350, %v347
    %v420 = vpack.c.b16 %v351, %v348
    %v421 = vpack.c.b16 %v352, %v349
    %v422 = vpack.c.b16 %v356, %v353
    %v423 = vpack.c.b16 %v357, %v354
    %v424 = vpack.c.b16 %v358, %v355
    %vm491 = vcmask 785408
    %v493 = vsel %vm491, %v33, 0
    %495 = vmatprep.subr.bf16.mxu0 %v381
    %496 = vmatpush1.bf16.msra.mxu0 %v380
    %497 = vmatprep.subr.bf16.mxu0 %v378
    %498 = vmatpush1.bf16.msra.mxu0 %v377
    %499 = vmatprep.subr.bf16.mxu0 %v375
    %500 = vmatpush1.bf16.msra.mxu0 %v374
    %501 = vmatprep.subr.bf16.mxu0 %v372
    %502 = vmatpush1.bf16.msra.mxu0 %v371
    %503 = vmatprep.subr.bf16.mxu0 %v369
    %504 = vmatpush1.bf16.msra.mxu0 %v368
    %505 = vmatprep.subr.bf16.mxu0 %v366
    %506 = vmatpush1.bf16.msra.mxu0 %v365
    %507 = vmatprep.subr.bf16.mxu0 %v363
    %508 = vmatpush1.bf16.msra.mxu0 %v362
    %509 = vmatprep.subr.bf16.mxu0 %v360
    %510 = vmatpush1.bf16.msra.mxu0 %v359
    %511 = vmatprep.subr.bf16.mxu0 %v405
    %512 = vmatpush2.bf16.msra.mxu0 %v404
    %513 = vmatprep.subr.bf16.mxu0 %v402
    %514 = vmatpush2.bf16.msra.mxu0 %v401
    %515 = vmatprep.subr.bf16.mxu0 %v399
    %516 = vmatpush2.bf16.msra.mxu0 %v398
    %517 = vmatprep.subr.bf16.mxu0 %v396
    %518 = vmatpush2.bf16.msra.mxu0 %v395
    %519 = vmatprep.subr.bf16.mxu0 %v393
    %520 = vmatpush2.bf16.msra.mxu0 %v392
    %521 = vmatprep.subr.bf16.mxu0 %v390
    %522 = vmatpush2.bf16.msra.mxu0 %v389
    %523 = vmatprep.subr.bf16.mxu0 %v387
    %524 = vmatpush2.bf16.msra.mxu0 %v386
    %525 = vmatprep.subr.bf16.mxu0 %v384
    %526 = vmatpush2.bf16.msra.mxu0 %v383
    %527 = vmatprep.mubr.bf16.mxu0 %v32
    %528 = vmatmul.mubr.bf16.gmra.mxu0 %v31
    %v529 = vpop.f32.mrf.mxu0
    %v530 = vadd.f32 %v127, %v529
    %v531 = vpop.f32.mrf.mxu0
    %v532 = vadd.f32 %v131, %v531
    %v533 = vpop.f32.mrf.mxu0
    %v534 = vpop.f32.mrf.mxu0
    %535 = vdwg.mxu0
    %536 = vmatprep.subr.bf16.mxu0 0
    %537 = vmatpush1.bf16.msra.mxu0 0
    %538 = vmatprep.subr.bf16.mxu0 0
    %539 = vmatpush1.bf16.msra.mxu0 0
    %540 = vmatprep.subr.bf16.mxu0 %v423
    %541 = vmatpush1.bf16.msra.mxu0 %v422
    %542 = vmatprep.subr.bf16.mxu0 %v420
    %543 = vmatpush1.bf16.msra.mxu0 %v419
    %544 = vmatprep.subr.bf16.mxu0 %v417
    %545 = vmatpush1.bf16.msra.mxu0 %v416
    %546 = vmatprep.subr.bf16.mxu0 %v414
    %547 = vmatpush1.bf16.msra.mxu0 %v413
    %548 = vmatprep.subr.bf16.mxu0 %v411
    %549 = vmatpush1.bf16.msra.mxu0 %v410
    %550 = vmatprep.subr.bf16.mxu0 %v408
    %551 = vmatpush1.bf16.msra.mxu0 %v407
    %552 = vmatprep.subr.bf16.mxu0 0
    %553 = vmatpush2.bf16.msra.mxu0 0
    %554 = vmatprep.subr.bf16.mxu0 0
    %555 = vmatpush2.bf16.msra.mxu0 0
    %556 = vmatprep.subr.bf16.mxu0 0
    %557 = vmatpush2.bf16.msra.mxu0 0
    %558 = vmatprep.subr.bf16.mxu0 0
    %559 = vmatpush2.bf16.msra.mxu0 0
    %560 = vmatprep.subr.bf16.mxu0 0
    %561 = vmatpush2.bf16.msra.mxu0 0
    %562 = vmatprep.subr.bf16.mxu0 0
    %563 = vmatpush2.bf16.msra.mxu0 0
    %564 = vmatprep.subr.bf16.mxu0 0
    %565 = vmatpush2.bf16.msra.mxu0 0
    %566 = vmatprep.subr.bf16.mxu0 0
    %567 = vmatpush2.bf16.msra.mxu0 0
    %568 = vmatprep.mubr.bf16.mxu0 0
    %569 = vmatmul.mubr.bf16.gmra.mxu0 %v493
    %v570 = vpop.f32.mrf.mxu0
    %v571 = vadd.f32 %v530, %v570
    %v572 = vpop.f32.mrf.mxu0
    %v573 = vadd.f32 %v532, %v572
    %v574 = vpop.f32.mrf.mxu0
    %v575 = vpop.f32.mrf.mxu0
    %576 = vdwg.mxu0
    %577 = vmatprep.subr.bf16.mxu0 0
    %578 = vmatpush1.bf16.msra.mxu0 %v382
    %579 = vmatprep.subr.bf16.mxu0 0
    %580 = vmatpush1.bf16.msra.mxu0 %v379
    %581 = vmatprep.subr.bf16.mxu0 0
    %582 = vmatpush1.bf16.msra.mxu0 %v376
    %583 = vmatprep.subr.bf16.mxu0 0
    %584 = vmatpush1.bf16.msra.mxu0 %v373
    %585 = vmatprep.subr.bf16.mxu0 0
    %586 = vmatpush1.bf16.msra.mxu0 %v370
    %587 = vmatprep.subr.bf16.mxu0 0
    %588 = vmatpush1.bf16.msra.mxu0 %v367
    %589 = vmatprep.subr.bf16.mxu0 0
    %590 = vmatpush1.bf16.msra.mxu0 %v364
    %591 = vmatprep.subr.bf16.mxu0 0
    %592 = vmatpush1.bf16.msra.mxu0 %v361
    %593 = vmatprep.subr.bf16.mxu0 0
    %594 = vmatpush2.bf16.msra.mxu0 %v406
    %595 = vmatprep.subr.bf16.mxu0 0
    %596 = vmatpush2.bf16.msra.mxu0 %v403
    %597 = vmatprep.subr.bf16.mxu0 0
    %598 = vmatpush2.bf16.msra.mxu0 %v400
    %599 = vmatprep.subr.bf16.mxu0 0
    %600 = vmatpush2.bf16.msra.mxu0 %v397
    %601 = vmatprep.subr.bf16.mxu0 0
    %602 = vmatpush2.bf16.msra.mxu0 %v394
    %603 = vmatprep.subr.bf16.mxu0 0
    %604 = vmatpush2.bf16.msra.mxu0 %v391
    %605 = vmatprep.subr.bf16.mxu0 0
    %606 = vmatpush2.bf16.msra.mxu0 %v388
    %607 = vmatprep.subr.bf16.mxu0 0
    %608 = vmatpush2.bf16.msra.mxu0 %v385
    %609 = vmatprep.mubr.bf16.mxu0 %v32
    %610 = vmatmul.mubr.bf16.gmra.mxu0 %v31
    %v611 = vpop.f32.mrf.mxu0
    %v612 = vadd.f32 %v135, %v611
    %v613 = vpop.f32.mrf.mxu0
    %v614 = vpop.f32.mrf.mxu0
    %v615 = vpop.f32.mrf.mxu0
    %616 = vdwg.mxu0
    %617 = vmatprep.subr.bf16.mxu0 0
    %618 = vmatpush1.bf16.msra.mxu0 0
    %619 = vmatprep.subr.bf16.mxu0 0
    %620 = vmatpush1.bf16.msra.mxu0 0
    %621 = vmatprep.subr.bf16.mxu0 0
    %622 = vmatpush1.bf16.msra.mxu0 %v424
    %623 = vmatprep.subr.bf16.mxu0 0
    %624 = vmatpush1.bf16.msra.mxu0 %v421
    %625 = vmatprep.subr.bf16.mxu0 0
    %626 = vmatpush1.bf16.msra.mxu0 %v418
    %627 = vmatprep.subr.bf16.mxu0 0
    %628 = vmatpush1.bf16.msra.mxu0 %v415
    %629 = vmatprep.subr.bf16.mxu0 0
    %630 = vmatpush1.bf16.msra.mxu0 %v412
    %631 = vmatprep.subr.bf16.mxu0 0
    %632 = vmatpush1.bf16.msra.mxu0 %v409
    %633 = vmatprep.subr.bf16.mxu0 0
    %634 = vmatpush2.bf16.msra.mxu0 0
    %635 = vmatprep.subr.bf16.mxu0 0
    %636 = vmatpush2.bf16.msra.mxu0 0
    %637 = vmatprep.subr.bf16.mxu0 0
    %638 = vmatpush2.bf16.msra.mxu0 0
    %639 = vmatprep.subr.bf16.mxu0 0
    %640 = vmatpush2.bf16.msra.mxu0 0
    %641 = vmatprep.subr.bf16.mxu0 0
    %642 = vmatpush2.bf16.msra.mxu0 0
    %643 = vmatprep.subr.bf16.mxu0 0
    %644 = vmatpush2.bf16.msra.mxu0 0
    %645 = vmatprep.subr.bf16.mxu0 0
    %646 = vmatpush2.bf16.msra.mxu0 0
    %647 = vmatprep.subr.bf16.mxu0 0
    %648 = vmatpush2.bf16.msra.mxu0 0
    %649 = vmatprep.mubr.bf16.mxu0 0
    %650 = vmatmul.mubr.bf16.gmra.mxu0 %v493
    %v651 = vpop.f32.mrf.mxu0
    %v652 = vadd.f32 %v612, %v651
    %v653 = vpop.f32.mrf.mxu0
    %v654 = vpop.f32.mrf.mxu0
    %v655 = vpop.f32.mrf.mxu0
    %656 = vdwg.mxu0
    %v657 = vmax.f32 %v571, 0.0
    %v658 = vmax.f32 %v573, 0.0
    %v659 = vmax.f32 %v652, 0.0
    %v660 = vpack.c.bf16 %v657, %v657
    %v661 = vpack.c.bf16 %v658, %v658
    %v662 = vpack.c.bf16 %v659, %v659
    %v663 = vld [vmem:[%s3] sm:$0xff]
    %v664 = vld [vmem:[%s3 + $0x8] sm:$0xff]
    %v665 = vld [vmem:[%s3 + $0x10] sm:$0xff]
    %v666 = vld [vmem:[%s3 + $0x18] sm:$0xff]
    %v667 = vld [vmem:[%s3 + $0x20] sm:$0xff]
    %v668 = vld [vmem:[%s3 + $0x28] sm:$0xff]
    %v669 = vld [vmem:[%s3 + $0x30] sm:$0xff]
    %v670 = vld [vmem:[%s3 + $0x38] sm:$0xff]
    %v671 = vld [vmem:[%s3 + $0x40] sm:$0xff]
    %v672 = vld [vmem:[%s3 + $0x48] sm:$0xff]
    %v673 = vld [vmem:[%s3 + $0x50] sm:$0xff]
    %v674 = vld [vmem:[%s3 + $0x58] sm:$0xff]
    %v675 = vld [vmem:[%s3 + $0x60] sm:$0xff]
    %v676 = vld [vmem:[%s3 + $0x68] sm:$0xff]
    %v677 = vld [vmem:[%s3 + $0x70] sm:$0xff]
    %v678 = vld [vmem:[%s3 + $0x78] sm:$0xff]
    %v679 = vld [vmem:[%s3 + $0x80] sm:$0xff]
    %v680 = vld [vmem:[%s3 + $0x88] sm:$0xff]
    %v681 = vld [vmem:[%s3 + $0x90] sm:$0xff]
    %v682 = vld [vmem:[%s3 + $0x98] sm:$0xff]
    %v683 = vld [vmem:[%s3 + $0xa0] sm:$0xff]
    %v684 = vld [vmem:[%s3 + $0xa8] sm:$0xff]
    %v685 = vld [vmem:[%s3 + $0xb0] sm:$0xff]
    %v686 = vld [vmem:[%s3 + $0xb8] sm:$0xff]
    %v687 = vld [vmem:[%s3 + $0xc0] sm:$0xff]
    %v688 = vld [vmem:[%s3 + $0xc8] sm:$0xff]
    %v689 = vld [vmem:[%s3 + $0xd0] sm:$0xff]
    %v690 = vld [vmem:[%s3 + $0xd8] sm:$0xff]
    %v691 = vld [vmem:[%s3 + $0xe0] sm:$0xff]
    %v692 = vld [vmem:[%s3 + $0xe8] sm:$0xff]
    %v693 = vld [vmem:[%s3 + $0xf0] sm:$0xff]
    %v694 = vld [vmem:[%s3 + $0xf8] sm:$0xff]
    %v695 = vld [vmem:[%s3 + $0x100] sm:$0xff]
    %v696 = vld [vmem:[%s3 + $0x108] sm:$0xff]
    %v697 = vld [vmem:[%s3 + $0x110] sm:$0xff]
    %v698 = vld [vmem:[%s3 + $0x118] sm:$0xff]
    %v699 = vld [vmem:[%s3 + $0x120] sm:$0xff]
    %v700 = vld [vmem:[%s3 + $0x128] sm:$0xff]
    %v701 = vld [vmem:[%s3 + $0x130] sm:$0xff]
    %v702 = vld [vmem:[%s3 + $0x138] sm:$0xff]
    %v703 = vld [vmem:[%s3 + $0x140] sm:$0xff]
    %v704 = vld [vmem:[%s3 + $0x148] sm:$0xff]
    %v705 = vld [vmem:[%s3 + $0x150] sm:$0xff]
    %v706 = vld [vmem:[%s3 + $0x158] sm:$0xff]
    %v707 = vld [vmem:[%s3 + $0x160] sm:$0xff]
    %v708 = vld [vmem:[%s3 + $0x168] sm:$0xff]
    %v709 = vld [vmem:[%s3 + $0x170] sm:$0xff]
    %v710 = vld [vmem:[%s3 + $0x178] sm:$0xff]
    %v711 = vld [vmem:[%s4] sm:$0x3]
    %v713 = vlaneseq
    %v714 = vshrl.u32 %v713, 7
    %v715 = vsub.s32 0, %v714
    %v716 = vrot.slane %v711, %v715
    %v717 = vlaneseq
    %v718 = vshrl.u32 %v717, 7
    %v719 = vsub.s32 1, %v718
    %v720 = vrot.slane %v711, %v719
    %v771 = vunpack.c.l.b16 %v663
    %v772 = vunpack.c.h.b16 %v663
    %v773 = vunpack.c.l.b16 %v664
    %v774 = vunpack.c.h.b16 %v664
    %v775 = vunpack.c.l.b16 %v665
    %v776 = vunpack.c.h.b16 %v665
    %v777 = vunpack.c.l.b16 %v666
    %v778 = vunpack.c.h.b16 %v666
    %v779 = vunpack.c.l.b16 %v667
    %v780 = vunpack.c.h.b16 %v667
    %v781 = vunpack.c.l.b16 %v668
    %v782 = vunpack.c.h.b16 %v668
    %v783 = vunpack.c.l.b16 %v669
    %v784 = vunpack.c.h.b16 %v669
    %v785 = vunpack.c.l.b16 %v670
    %v786 = vunpack.c.h.b16 %v670
    %v787 = vunpack.c.l.b16 %v671
    %v788 = vunpack.c.h.b16 %v671
    %v789 = vunpack.c.l.b16 %v672
    %v790 = vunpack.c.h.b16 %v672
    %v791 = vunpack.c.l.b16 %v673
    %v792 = vunpack.c.h.b16 %v673
    %v793 = vunpack.c.l.b16 %v674
    %v794 = vunpack.c.h.b16 %v674
    %v795 = vunpack.c.l.b16 %v675
    %v796 = vunpack.c.h.b16 %v675
    %v797 = vunpack.c.l.b16 %v676
    %v798 = vunpack.c.h.b16 %v676
    %v799 = vunpack.c.l.b16 %v677
    %v800 = vunpack.c.h.b16 %v677
    %v801 = vunpack.c.l.b16 %v678
    %v802 = vunpack.c.h.b16 %v678
    %v803 = vunpack.c.l.b16 %v679
    %v804 = vunpack.c.h.b16 %v679
    %v805 = vunpack.c.l.b16 %v680
    %v806 = vunpack.c.h.b16 %v680
    %v807 = vunpack.c.l.b16 %v681
    %v808 = vunpack.c.h.b16 %v681
    %v809 = vunpack.c.l.b16 %v682
    %v810 = vunpack.c.h.b16 %v682
    %v811 = vunpack.c.l.b16 %v683
    %v812 = vunpack.c.h.b16 %v683
    %v813 = vunpack.c.l.b16 %v684
    %v814 = vunpack.c.h.b16 %v684
    %v815 = vunpack.c.l.b16 %v685
    %v816 = vunpack.c.h.b16 %v685
    %v817 = vunpack.c.l.b16 %v686
    %v818 = vunpack.c.h.b16 %v686
    %v819 = vunpack.c.l.b16 %v687
    %v820 = vunpack.c.h.b16 %v687
    %v821 = vunpack.c.l.b16 %v688
    %v822 = vunpack.c.h.b16 %v688
    %v823 = vunpack.c.l.b16 %v689
    %v824 = vunpack.c.h.b16 %v689
    %v825 = vunpack.c.l.b16 %v690
    %v826 = vunpack.c.h.b16 %v690
    %v827 = vunpack.c.l.b16 %v691
    %v828 = vunpack.c.h.b16 %v691
    %v829 = vunpack.c.l.b16 %v692
    %v830 = vunpack.c.h.b16 %v692
    %v831 = vunpack.c.l.b16 %v693
    %v832 = vunpack.c.h.b16 %v693
    %v833 = vunpack.c.l.b16 %v694
    %v834 = vunpack.c.h.b16 %v694
    %v835 = vunpack.c.l.b16 %v695
    %v836 = vunpack.c.h.b16 %v695
    %v837 = vunpack.c.l.b16 %v696
    %v838 = vunpack.c.h.b16 %v696
    %v839 = vunpack.c.l.b16 %v697
    %v840 = vunpack.c.h.b16 %v697
    %v841 = vunpack.c.l.b16 %v698
    %v842 = vunpack.c.h.b16 %v698
    %v843 = vunpack.c.l.b16 %v699
    %v844 = vunpack.c.h.b16 %v699
    %v845 = vunpack.c.l.b16 %v700
    %v846 = vunpack.c.h.b16 %v700
    %v847 = vunpack.c.l.b16 %v701
    %v848 = vunpack.c.h.b16 %v701
    %v849 = vunpack.c.l.b16 %v702
    %v850 = vunpack.c.h.b16 %v702
    %v851 = vunpack.c.l.b16 %v703
    %v852 = vunpack.c.h.b16 %v703
    %v853 = vunpack.c.l.b16 %v704
    %v854 = vunpack.c.h.b16 %v704
    %v855 = vunpack.c.l.b16 %v705
    %v856 = vunpack.c.h.b16 %v705
    %v857 = vunpack.c.l.b16 %v706
    %v858 = vunpack.c.h.b16 %v706
    %v859 = vunpack.c.l.b16 %v707
    %v860 = vunpack.c.h.b16 %v707
    %v861 = vunpack.c.l.b16 %v708
    %v862 = vunpack.c.h.b16 %v708
    %v863 = vunpack.c.l.b16 %v709
    %v864 = vunpack.c.h.b16 %v709
    %v865 = vunpack.c.l.b16 %v710
    %v866 = vunpack.c.h.b16 %v710
    %v867 = vpack.c.b16 %v773, %v771
    %v868 = vpack.c.b16 %v774, %v772
    %v869 = vpack.c.b16 %v777, %v775
    %v870 = vpack.c.b16 %v778, %v776
    %v871 = vpack.c.b16 %v781, %v779
    %v872 = vpack.c.b16 %v782, %v780
    %v873 = vpack.c.b16 %v785, %v783
    %v874 = vpack.c.b16 %v786, %v784
    %v875 = vpack.c.b16 %v789, %v787
    %v876 = vpack.c.b16 %v790, %v788
    %v877 = vpack.c.b16 %v793, %v791
    %v878 = vpack.c.b16 %v794, %v792
    %v879 = vpack.c.b16 %v797, %v795
    %v880 = vpack.c.b16 %v798, %v796
    %v881 = vpack.c.b16 %v801, %v799
    %v882 = vpack.c.b16 %v802, %v800
    %v883 = vpack.c.b16 %v805, %v803
    %v884 = vpack.c.b16 %v806, %v804
    %v885 = vpack.c.b16 %v809, %v807
    %v886 = vpack.c.b16 %v810, %v808
    %v887 = vpack.c.b16 %v813, %v811
    %v888 = vpack.c.b16 %v814, %v812
    %v889 = vpack.c.b16 %v817, %v815
    %v890 = vpack.c.b16 %v818, %v816
    %v891 = vpack.c.b16 %v821, %v819
    %v892 = vpack.c.b16 %v822, %v820
    %v893 = vpack.c.b16 %v825, %v823
    %v894 = vpack.c.b16 %v826, %v824
    %v895 = vpack.c.b16 %v829, %v827
    %v896 = vpack.c.b16 %v830, %v828
    %v897 = vpack.c.b16 %v833, %v831
    %v898 = vpack.c.b16 %v834, %v832
    %v899 = vpack.c.b16 %v837, %v835
    %v900 = vpack.c.b16 %v838, %v836
    %v901 = vpack.c.b16 %v841, %v839
    %v902 = vpack.c.b16 %v842, %v840
    %v903 = vpack.c.b16 %v845, %v843
    %v904 = vpack.c.b16 %v846, %v844
    %v905 = vpack.c.b16 %v849, %v847
    %v906 = vpack.c.b16 %v850, %v848
    %v907 = vpack.c.b16 %v853, %v851
    %v908 = vpack.c.b16 %v854, %v852
    %v909 = vpack.c.b16 %v857, %v855
    %v910 = vpack.c.b16 %v858, %v856
    %v911 = vpack.c.b16 %v861, %v859
    %v912 = vpack.c.b16 %v862, %v860
    %v913 = vpack.c.b16 %v865, %v863
    %v914 = vpack.c.b16 %v866, %v864
    %963 = vmatprep.subr.bf16.mxu0 %v882
    %964 = vmatpush1.bf16.msra.mxu0 %v881
    %965 = vmatprep.subr.bf16.mxu0 %v880
    %966 = vmatpush1.bf16.msra.mxu0 %v879
    %967 = vmatprep.subr.bf16.mxu0 %v878
    %968 = vmatpush1.bf16.msra.mxu0 %v877
    %969 = vmatprep.subr.bf16.mxu0 %v876
    %970 = vmatpush1.bf16.msra.mxu0 %v875
    %971 = vmatprep.subr.bf16.mxu0 %v874
    %972 = vmatpush1.bf16.msra.mxu0 %v873
    %973 = vmatprep.subr.bf16.mxu0 %v872
    %974 = vmatpush1.bf16.msra.mxu0 %v871
    %975 = vmatprep.subr.bf16.mxu0 %v870
    %976 = vmatpush1.bf16.msra.mxu0 %v869
    %977 = vmatprep.subr.bf16.mxu0 %v868
    %978 = vmatpush1.bf16.msra.mxu0 %v867
    %979 = vmatprep.subr.bf16.mxu0 %v898
    %980 = vmatpush2.bf16.msra.mxu0 %v897
    %981 = vmatprep.subr.bf16.mxu0 %v896
    %982 = vmatpush2.bf16.msra.mxu0 %v895
    %983 = vmatprep.subr.bf16.mxu0 %v894
    %984 = vmatpush2.bf16.msra.mxu0 %v893
    %985 = vmatprep.subr.bf16.mxu0 %v892
    %986 = vmatpush2.bf16.msra.mxu0 %v891
    %987 = vmatprep.subr.bf16.mxu0 %v890
    %988 = vmatpush2.bf16.msra.mxu0 %v889
    %989 = vmatprep.subr.bf16.mxu0 %v888
    %990 = vmatpush2.bf16.msra.mxu0 %v887
    %991 = vmatprep.subr.bf16.mxu0 %v886
    %992 = vmatpush2.bf16.msra.mxu0 %v885
    %993 = vmatprep.subr.bf16.mxu0 %v884
    %994 = vmatpush2.bf16.msra.mxu0 %v883
    %995 = vmatprep.mubr.bf16.mxu0 %v661
    %996 = vmatmul.mubr.bf16.gmra.mxu0 %v660
    %v997 = vpop.f32.mrf.mxu0
    %v998 = vadd.f32 %v716, %v997
    %v999 = vpop.f32.mrf.mxu0
    %v1000 = vadd.f32 %v720, %v999
    %v1001 = vpop.f32.mrf.mxu0
    %v1002 = vpop.f32.mrf.mxu0
    %1003 = vdwg.mxu0
    %1004 = vmatprep.subr.bf16.mxu0 %v914
    %1005 = vmatpush1.bf16.msra.mxu0 %v913
    %1006 = vmatprep.subr.bf16.mxu0 %v912
    %1007 = vmatpush1.bf16.msra.mxu0 %v911
    %1008 = vmatprep.subr.bf16.mxu0 %v910
    %1009 = vmatpush1.bf16.msra.mxu0 %v909
    %1010 = vmatprep.subr.bf16.mxu0 %v908
    %1011 = vmatpush1.bf16.msra.mxu0 %v907
    %1012 = vmatprep.subr.bf16.mxu0 %v906
    %1013 = vmatpush1.bf16.msra.mxu0 %v905
    %1014 = vmatprep.subr.bf16.mxu0 %v904
    %1015 = vmatpush1.bf16.msra.mxu0 %v903
    %1016 = vmatprep.subr.bf16.mxu0 %v902
    %1017 = vmatpush1.bf16.msra.mxu0 %v901
    %1018 = vmatprep.subr.bf16.mxu0 %v900
    %1019 = vmatpush1.bf16.msra.mxu0 %v899
    %1020 = vmatprep.subr.bf16.mxu0 0
    %1021 = vmatpush2.bf16.msra.mxu0 0
    %1022 = vmatprep.subr.bf16.mxu0 0
    %1023 = vmatpush2.bf16.msra.mxu0 0
    %1024 = vmatprep.subr.bf16.mxu0 0
    %1025 = vmatpush2.bf16.msra.mxu0 0
    %1026 = vmatprep.subr.bf16.mxu0 0
    %1027 = vmatpush2.bf16.msra.mxu0 0
    %1028 = vmatprep.subr.bf16.mxu0 0
    %1029 = vmatpush2.bf16.msra.mxu0 0
    %1030 = vmatprep.subr.bf16.mxu0 0
    %1031 = vmatpush2.bf16.msra.mxu0 0
    %1032 = vmatprep.subr.bf16.mxu0 0
    %1033 = vmatpush2.bf16.msra.mxu0 0
    %1034 = vmatprep.subr.bf16.mxu0 0
    %1035 = vmatpush2.bf16.msra.mxu0 0
    %1036 = vmatprep.mubr.bf16.mxu0 0
    %1037 = vmatmul.mubr.bf16.gmra.mxu0 %v662
    %v1038 = vpop.f32.mrf.mxu0
    %v1039 = vadd.f32 %v998, %v1038
    %v1040 = vpop.f32.mrf.mxu0
    %v1041 = vadd.f32 %v1000, %v1040
    %v1042 = vpop.f32.mrf.mxu0
    %v1043 = vpop.f32.mrf.mxu0
    %1044 = vdwg.mxu0
    %v1045 = vmax.f32 %v1039, 0.0
    %v1046 = vmax.f32 %v1041, 0.0
    %v1047 = vpack.c.bf16 %v1045, %v1045
    %v1048 = vpack.c.bf16 %v1046, %v1046
    %v1049 = vld [vmem:[%s5] sm:$0xf]
    %v1050 = vld [vmem:[%s5 + $0x4] sm:$0xf]
    %v1051 = vld [vmem:[%s5 + $0x8] sm:$0xf]
    %v1052 = vld [vmem:[%s5 + $0xc] sm:$0xf]
    %v1053 = vld [vmem:[%s5 + $0x10] sm:$0xf]
    %v1054 = vld [vmem:[%s5 + $0x14] sm:$0xf]
    %v1055 = vld [vmem:[%s5 + $0x18] sm:$0xf]
    %v1056 = vld [vmem:[%s5 + $0x1c] sm:$0xf]
    %v1057 = vld [vmem:[%s5 + $0x20] sm:$0xf]
    %v1058 = vld [vmem:[%s5 + $0x24] sm:$0xf]
    %v1059 = vld [vmem:[%s5 + $0x28] sm:$0xf]
    %v1060 = vld [vmem:[%s5 + $0x2c] sm:$0xf]
    %v1061 = vld [vmem:[%s5 + $0x30] sm:$0xf]
    %v1062 = vld [vmem:[%s5 + $0x34] sm:$0xf]
    %v1063 = vld [vmem:[%s5 + $0x38] sm:$0xf]
    %v1064 = vld [vmem:[%s5 + $0x3c] sm:$0xf]
    %v1065 = vld [vmem:[%s5 + $0x40] sm:$0xf]
    %v1066 = vld [vmem:[%s5 + $0x44] sm:$0xf]
    %v1067 = vld [vmem:[%s5 + $0x48] sm:$0xf]
    %v1068 = vld [vmem:[%s5 + $0x4c] sm:$0xf]
    %v1069 = vld [vmem:[%s5 + $0x50] sm:$0xf]
    %v1070 = vld [vmem:[%s5 + $0x54] sm:$0xf]
    %v1071 = vld [vmem:[%s5 + $0x58] sm:$0xf]
    %v1072 = vld [vmem:[%s5 + $0x5c] sm:$0xf]
    %v1073 = vld [vmem:[%s6] sm:$0x1]
    %v1075 = vlaneseq
    %v1076 = vshrl.u32 %v1075, 7
    %v1077 = vsub.s32 0, %v1076
    %v1078 = vrot.slane %v1073, %v1077
    %v1104 = vunpack.c.l.b16 %v1049
    %v1105 = vunpack.c.l.b16 %v1050
    %v1106 = vunpack.c.l.b16 %v1051
    %v1107 = vunpack.c.l.b16 %v1052
    %v1108 = vunpack.c.l.b16 %v1053
    %v1109 = vunpack.c.l.b16 %v1054
    %v1110 = vunpack.c.l.b16 %v1055
    %v1111 = vunpack.c.l.b16 %v1056
    %v1112 = vunpack.c.l.b16 %v1057
    %v1113 = vunpack.c.l.b16 %v1058
    %v1114 = vunpack.c.l.b16 %v1059
    %v1115 = vunpack.c.l.b16 %v1060
    %v1116 = vunpack.c.l.b16 %v1061
    %v1117 = vunpack.c.l.b16 %v1062
    %v1118 = vunpack.c.l.b16 %v1063
    %v1119 = vunpack.c.l.b16 %v1064
    %v1120 = vunpack.c.l.b16 %v1065
    %v1121 = vunpack.c.l.b16 %v1066
    %v1122 = vunpack.c.l.b16 %v1067
    %v1123 = vunpack.c.l.b16 %v1068
    %v1124 = vunpack.c.l.b16 %v1069
    %v1125 = vunpack.c.l.b16 %v1070
    %v1126 = vunpack.c.l.b16 %v1071
    %v1127 = vunpack.c.l.b16 %v1072
    %v1128 = vpack.c.b16 %v1105, %v1104
    %v1129 = vpack.c.b16 %v1107, %v1106
    %v1130 = vpack.c.b16 %v1109, %v1108
    %v1131 = vpack.c.b16 %v1111, %v1110
    %v1132 = vpack.c.b16 %v1113, %v1112
    %v1133 = vpack.c.b16 %v1115, %v1114
    %v1134 = vpack.c.b16 %v1117, %v1116
    %v1135 = vpack.c.b16 %v1119, %v1118
    %v1136 = vpack.c.b16 %v1121, %v1120
    %v1137 = vpack.c.b16 %v1123, %v1122
    %v1138 = vpack.c.b16 %v1125, %v1124
    %v1139 = vpack.c.b16 %v1127, %v1126
    %vm1152 = vcmask 523264
    %v1154 = vsel %vm1152, %v1048, 0
    %1156 = vmatprep.subr.bf16.mxu0 0
    %1157 = vmatpush1.bf16.msra.mxu0 %v1135
    %1158 = vmatprep.subr.bf16.mxu0 0
    %1159 = vmatpush1.bf16.msra.mxu0 %v1134
    %1160 = vmatprep.subr.bf16.mxu0 0
    %1161 = vmatpush1.bf16.msra.mxu0 %v1133
    %1162 = vmatprep.subr.bf16.mxu0 0
    %1163 = vmatpush1.bf16.msra.mxu0 %v1132
    %1164 = vmatprep.subr.bf16.mxu0 0
    %1165 = vmatpush1.bf16.msra.mxu0 %v1131
    %1166 = vmatprep.subr.bf16.mxu0 0
    %1167 = vmatpush1.bf16.msra.mxu0 %v1130
    %1168 = vmatprep.subr.bf16.mxu0 0
    %1169 = vmatpush1.bf16.msra.mxu0 %v1129
    %1170 = vmatprep.subr.bf16.mxu0 0
    %1171 = vmatpush1.bf16.msra.mxu0 %v1128
    %1172 = vmatprep.subr.bf16.mxu0 0
    %1173 = vmatpush2.bf16.msra.mxu0 0
    %1174 = vmatprep.subr.bf16.mxu0 0
    %1175 = vmatpush2.bf16.msra.mxu0 0
    %1176 = vmatprep.subr.bf16.mxu0 0
    %1177 = vmatpush2.bf16.msra.mxu0 0
    %1178 = vmatprep.subr.bf16.mxu0 0
    %1179 = vmatpush2.bf16.msra.mxu0 0
    %1180 = vmatprep.subr.bf16.mxu0 0
    %1181 = vmatpush2.bf16.msra.mxu0 %v1139
    %1182 = vmatprep.subr.bf16.mxu0 0
    %1183 = vmatpush2.bf16.msra.mxu0 %v1138
    %1184 = vmatprep.subr.bf16.mxu0 0
    %1185 = vmatpush2.bf16.msra.mxu0 %v1137
    %1186 = vmatprep.subr.bf16.mxu0 0
    %1187 = vmatpush2.bf16.msra.mxu0 %v1136
    %1188 = vmatprep.mubr.bf16.mxu0 %v1154
    %1189 = vmatmul.mubr.bf16.gmra.mxu0 %v1047
    %v1190 = vpop.f32.mrf.mxu0
    %v1191 = vadd.f32 %v1078, %v1190
    %v1192 = vpop.f32.mrf.mxu0
    %v1193 = vpop.f32.mrf.mxu0
    %v1194 = vpop.f32.mrf.mxu0
    %1195 = vdwg.mxu0
    %v1196 = vpack.c.bf16 %v1191, %v1191
    %1197 = vst [vmem:[#allocation2] sm:$0xf] %v1196
    // Predicated region
    $region30: #{tpu_custom_call.1} parent=1 // pred_check
      _
    $region31: #{tpu_custom_call.1} parent=1 // pred_check_branch
      %1199 = sbr.rel (0) target = $region33
    $region32: #{tpu_custom_call.1} parent=1 // pred_region
      %s1201 = ssub.s32 64, 64
      %1202 = vsyncadd [#allocation3], %s1201
      %s1204 = sshll.u32 [#allocation2], 4
      %s1205 = int_to_ptr.vmem [resolvable:$true] %s1204
      %1207 = dma.vmem_to_hbm [thread:$0]  %s1205, 64, %s7, [#allocation3]
    $region33: #{tpu_custom_call.1} parent=1 // pred_fallthru
      _
    // Predicated region
    $region34: #{tpu_custom_call.1} parent=1 // pred_check
      _
    $region35: #{tpu_custom_call.1} parent=1 // pred_check_branch
      %1209 = sbr.rel (0) target = $region37
    $region36: #{tpu_custom_call.1} parent=1 // pred_region
      %1210 = dma.done [#allocation3], 64
    $region37: #{tpu_custom_call.1} parent=1 // pred_fallthru
      _
    %1211 = vsyncpa [#allocation3], 1

</llo_original>
